<compile_context>
chip_gen: v7x
topology: tpu7x:2x2x1
jax: 0.10.0
libtpu: 0.0.40
codegen_flags: <defaults>
</compile_context>

<pallas_src>
import functools

import jax
import jax.numpy as jnp
from jax import lax
from jax.experimental import pallas as pl
from jax.experimental.pallas import tpu as pltpu

NUM_CLASSES = 80
N_CH = 5 + NUM_CLASSES
ANCHORS = [(10, 13), (16, 30), (33, 23), (30, 61), (62, 45),
           (42, 119), (116, 90), (156, 198), (121, 240)]


def _round_up(x, m):
    return (x + m - 1) // m * m


def _pick_tk(kp):
    for t in (512, 384, 256, 128):
        if kp % t == 0:
            return t
    return 128


def _pick_tn(np_):
    return 256 if np_ % 256 == 0 else 128


# ----------------------------------------------------------------------------
# Pallas kernel 1: M/N/K-tiled matmul + per-channel affine (folded BN / bias)
#                  + optional LeakyReLU(0.1).  This is every conv in the net.
#                  bf16 operands, f32 accumulation in a (TM, TN) VMEM scratch.
# ----------------------------------------------------------------------------
def _mm_affine_act_kernel(x_ref, w_ref, s_ref, b_ref, o_ref, acc_ref, *, leaky):
    k = pl.program_id(2)

    @pl.when(k == 0)
    def _():
        acc_ref[...] = jnp.zeros_like(acc_ref)

    acc_ref[...] += jnp.dot(x_ref[...], w_ref[...],
                            preferred_element_type=jnp.float32)

    @pl.when(k == pl.num_programs(2) - 1)
    def _():
        y = acc_ref[...] * s_ref[...] + b_ref[...]
        if leaky:
            y = jnp.where(y > 0, y, 0.1 * y)
        o_ref[...] = y


@functools.partial(jax.jit, static_argnames=("n_out", "tk", "tn", "leaky"))
def _matmul_affine_act(x, wp, sp, bp, *, n_out, tk, tn, leaky):
    """x: (M, K) f32, wp: (Kp, Np) bf16 pre-packed, sp/bp: (1, Np) f32."""
    M, K = x.shape
    Kp, Np = wp.shape
    TM = min(512, _round_up(max(M, 8), 8))
    Mp = _round_up(M, TM)

    xp = jnp.pad(x.astype(jnp.bfloat16), ((0, Mp - M), (0, Kp - K)))

    grid = (Mp // TM, Np // tn, Kp // tk)
    out = pl.pallas_call(
        functools.partial(_mm_affine_act_kernel, leaky=leaky),
        out_shape=jax.ShapeDtypeStruct((Mp, Np), jnp.float32),
        grid_spec=pltpu.PrefetchScalarGridSpec(
            num_scalar_prefetch=0,
            grid=grid,
            in_specs=[
                pl.BlockSpec((TM, tk), lambda i, j, k: (i, k)),
                pl.BlockSpec((tk, tn), lambda i, j, k: (k, j)),
                pl.BlockSpec((1, tn), lambda i, j, k: (0, j)),
                pl.BlockSpec((1, tn), lambda i, j, k: (0, j)),
            ],
            out_specs=pl.BlockSpec((TM, tn), lambda i, j, k: (i, j)),
            scratch_shapes=[pltpu.VMEM((TM, tn), jnp.float32)],
        ),
        compiler_params=pltpu.CompilerParams(
            dimension_semantics=("parallel", "parallel", "arbitrary")),
    )(xp, wp, sp, bp)
    return out[:M, :n_out]


def pack_matmul(w2d, scale, bias):
    """Pre-pad / pre-cast weights + affine so the per-call path only pads x."""
    K, N = w2d.shape
    Kp = _round_up(K, 128)
    Np = _round_up(N, 128)
    wp = jnp.pad(w2d.astype(jnp.float32),
                 ((0, Kp - K), (0, Np - N))).astype(jnp.bfloat16)
    sp = jnp.pad(scale.astype(jnp.float32), (0, Np - N)).reshape(1, Np)
    bp = jnp.pad(bias.astype(jnp.float32), (0, Np - N)).reshape(1, Np)
    return dict(wp=wp, sp=sp, bp=bp, K=K, N=N, TK=_pick_tk(Kp), TN=_pick_tn(Np))


def run_packed(x2d, mm, leaky):
    return _matmul_affine_act(x2d, mm["wp"], mm["sp"], mm["bp"],
                              n_out=mm["N"], tk=mm["TK"], tn=mm["TN"],
                              leaky=leaky)


# ----------------------------------------------------------------------------
# Pallas kernel 2: YOLO head box decode (elementwise hot path).
# rows are flattened (batch, anchor, gy, gx); columns are 5+num_classes
# channels padded to 128 lanes.  cols 0,1 -> (sigmoid + grid shift) * stride,
# cols 2,3 -> exp * anchor scale (packed (M,2) side input), cols 4.. -> sigmoid.
# ----------------------------------------------------------------------------
def _head_decode_kernel(o_ref, wh_ref, p_ref, *, stride, fsize):
    o = o_ref[...]
    tm, c = o.shape
    row0 = pl.program_id(0) * tm
    row = row0 + lax.broadcasted_iota(jnp.int32, (tm, c), 0)
    col = lax.broadcasted_iota(jnp.int32, (tm, c), 1)
    gx = (row % fsize).astype(jnp.float32)
    gy = ((row // fsize) % fsize).astype(jnp.float32)

    sig = jax.nn.sigmoid(o)
    # only exponentiate where needed (cols 2,3) — keeps EUP work down and is
    # overflow-safe for the discarded columns.
    ex = jnp.exp(jnp.where((col == 2) | (col == 3), o, 0.0))
    ws = wh_ref[:, 0:1]
    hs = wh_ref[:, 1:2]
    c0 = (sig + gx) * stride
    c1 = (sig + gy) * stride
    c2 = ex * ws
    c3 = ex * hs
    p = jnp.where(col == 0, c0,
        jnp.where(col == 1, c1,
        jnp.where(col == 2, c2,
        jnp.where(col == 3, c3, sig))))
    p_ref[...] = p


@functools.partial(jax.jit, static_argnames=("stride", "fsize"))
def head_decode(out_raw, wh_scaled, *, stride, fsize):
    M, C = out_raw.shape          # C = 85
    Cp = 128
    TM = min(512, _round_up(max(M, 8), 8))
    Mp = _round_up(M, TM)
    op = jnp.pad(out_raw.astype(jnp.float32), ((0, Mp - M), (0, Cp - C)))
    whp = jnp.pad(wh_scaled.astype(jnp.float32), ((0, Mp - M), (0, 0)))
    out = pl.pallas_call(
        functools.partial(_head_decode_kernel, stride=float(stride),
                          fsize=int(fsize)),
        out_shape=jax.ShapeDtypeStruct((Mp, Cp), jnp.float32),
        grid_spec=pltpu.PrefetchScalarGridSpec(
            num_scalar_prefetch=0,
            grid=(Mp // TM,),
            in_specs=[pl.BlockSpec((TM, Cp), lambda i: (i, 0)),
                      pl.BlockSpec((TM, 2), lambda i: (i, 0))],
            out_specs=pl.BlockSpec((TM, Cp), lambda i: (i, 0)),
        ),
        compiler_params=pltpu.CompilerParams(
            dimension_semantics=("parallel",)),
    )(op, whp)
    return out[:M, :C]


# ----------------------------------------------------------------------------
# Plain-JAX glue
# ----------------------------------------------------------------------------
def im2col(x, k, stride):
    """NHWC -> (N, Ho, Wo, k*k*C), patch order (ky, kx, c); pad = k//2 (zeros)."""
    if k == 1 and stride == 1:
        return x
    B, H, W, C = x.shape
    pad = k // 2
    xp = jnp.pad(x, ((0, 0), (pad, pad), (pad, pad), (0, 0)))
    Ho = (H + 2 * pad - k) // stride + 1
    Wo = (W + 2 * pad - k) // stride + 1
    cols = []
    for dy in range(k):
        for dx in range(k):
            cols.append(xp[:, dy:dy + stride * (Ho - 1) + 1:stride,
                              dx:dx + stride * (Wo - 1) + 1:stride, :])
    return jnp.concatenate(cols, axis=-1)


def run_conv(p, x):
    """add_conv: Conv(no bias) + folded BN + LeakyReLU(0.1), Pallas matmul."""
    cols = im2col(x, p["ksize"], p["stride"])
    B, Ho, Wo, K = cols.shape
    y = run_packed(cols.reshape(B * Ho * Wo, K), p["mm"], leaky=True)
    return y.reshape(B, Ho, Wo, p["mm"]["N"])


def run_resblock(p, x):
    for c1, c2 in p["blocks"]:
        h = run_conv(c1, x)
        h = run_conv(c2, h)
        x = x + h if p["shortcut"] else h
    return x


def run_spp(x):
    """SPP: concat of max-pools k=5,9,13 (stride 1, same padding), separable."""
    def mp(k):
        pad = k // 2
        r = lax.reduce_window(x, -jnp.inf, lax.max, (1, 1, k, 1), (1, 1, 1, 1),
                              [(0, 0), (0, 0), (pad, pad), (0, 0)])
        return lax.reduce_window(r, -jnp.inf, lax.max, (1, k, 1, 1), (1, 1, 1, 1),
                                 [(0, 0), (pad, pad), (0, 0), (0, 0)])
    return jnp.concatenate([x, mp(5), mp(9), mp(13)], axis=-1)


def upsample2x(x):
    return jnp.repeat(jnp.repeat(x, 2, axis=1), 2, axis=2)


def deform_im2col(x, offsets, dg):
    """Deformable-conv bilinear sampling (3x3, stride 1, pad 1, zero padding).

    x: (B,H,W,C), offsets: (B,H,W,dg*9*2) ordered (group, kernel_pos, (dy,dx)).
    Returns (B,H,W,9*C) ordered (kernel_pos, channel) to match weight flatten.
    """
    B, H, W, C = x.shape
    Cg = C // dg
    off = offsets.reshape(B, H, W, dg, 9, 2)
    rr = (jnp.arange(9) // 3).astype(jnp.float32)
    cc = (jnp.arange(9) % 3).astype(jnp.float32)
    ii = jnp.arange(H, dtype=jnp.float32)[None, :, None, None, None]
    jj = jnp.arange(W, dtype=jnp.float32)[None, None, :, None, None]
    py = ii + rr[None, None, None, None, :] - 1.0 + off[..., 0]  # (B,H,W,dg,9)
    px = jj + cc[None, None, None, None, :] - 1.0 + off[..., 1]
    xg = x.reshape(B, H, W, dg, Cg)
    y0 = jnp.floor(py)
    x0 = jnp.floor(px)
    wy1 = py - y0
    wy0 = 1.0 - wy1
    wx1 = px - x0
    wx0 = 1.0 - wx1

    b_idx = jnp.arange(B)[:, None, None, None, None]
    g_idx = jnp.arange(dg)[None, None, None, :, None]

    def corner(yc, xc, wgt):
        valid = (yc >= 0) & (yc <= H - 1) & (xc >= 0) & (xc <= W - 1)
        yi = jnp.clip(yc, 0, H - 1).astype(jnp.int32)
        xi = jnp.clip(xc, 0, W - 1).astype(jnp.int32)
        vals = xg[b_idx, yi, xi, g_idx]  # (B,H,W,dg,9,Cg)
        return vals * (wgt * valid.astype(jnp.float32))[..., None]

    out = (corner(y0, x0, wy0 * wx0) + corner(y0, x0 + 1.0, wy0 * wx1) +
           corner(y0 + 1.0, x0, wy1 * wx0) + corner(y0 + 1.0, x0 + 1.0, wy1 * wx1))
    out = jnp.transpose(out, (0, 1, 2, 4, 3, 5)).reshape(B, H, W, 9 * C)
    return out


def run_head(p, x):
    """YOLOv3Head forward. x: NHWC (B, f, f, in_ch).
    Returns (refined_pred (B, 4*f*f, n_ch), pred_new (B, f*f, 4, n_ch))."""
    B, f, _, in_ch = x.shape
    stride = p["stride"]
    Msp = B * f * f

    # guide_wh : 1x1 conv with bias -> (B,f,f,8)
    wh_raw = run_packed(x.reshape(Msp, in_ch), p["guide"],
                        leaky=False).reshape(B, f, f, 8)

    # Feature_adaption : grouped 1x1 offset conv (glue) + deformable 3x3 conv
    off_in = wh_raw.reshape(B, f, f, 4, 2)
    offsets = jnp.einsum("bhwgi,gio->bhwgo", off_in, p["off_w"]) + p["off_b"]
    offsets = offsets.reshape(B, f, f, 4 * 18)
    dcols = deform_im2col(x, offsets, dg=4)  # (B,f,f,9*in_ch)
    feat = run_packed(dcols.reshape(Msp, 9 * in_ch), p["dconv"],
                      leaky=False).reshape(B, f, f, in_ch)

    # prediction conv : 1x1 with bias -> (B,f,f,4*n_ch)
    out_raw = run_packed(feat.reshape(Msp, in_ch), p["head"],
                         leaky=False).reshape(B, f, f, 4 * N_CH)

    # reshape to (B, 4, f, f, n_ch) / (B, 4, f, f, 2)  (== NCHW view+permute)
    out = out_raw.reshape(B, f, f, 4, N_CH).transpose(0, 3, 1, 2, 4)
    wh = jnp.exp(wh_raw).reshape(B, f, f, 4, 2).transpose(0, 3, 1, 2, 4)

    # anchor scales: 3 masked anchors + 1 "anchor-free" (stride*4)
    aw = jnp.array([p["anchors"][0][0], p["anchors"][1][0],
                    p["anchors"][2][0], stride * 4.0], jnp.float32)
    ah = jnp.array([p["anchors"][0][1], p["anchors"][1][1],
                    p["anchors"][2][1], stride * 4.0], jnp.float32)
    ws = wh[..., 0] * aw[None, :, None, None]    # pred_anchors[..., 2]
    hs = wh[..., 1] * ah[None, :, None, None]    # pred_anchors[..., 3]

    M = B * 4 * f * f
    wh_scaled = jnp.stack([ws, hs], axis=-1).reshape(M, 2)
    pred = head_decode(out.reshape(M, N_CH), wh_scaled, stride=stride, fsize=f)
    pred = pred.reshape(B, 4, f, f, N_CH)
    refined = pred.reshape(B, 4 * f * f, N_CH)
    pred_new = pred.reshape(B, 4, f * f, N_CH).transpose(0, 2, 1, 3)
    return refined, pred_new


# ----------------------------------------------------------------------------
# Deterministic parameter construction (synthetic weights).
# ----------------------------------------------------------------------------
class KeyGen:
    def __init__(self, seed=0):
        self._key = jax.random.PRNGKey(seed)
        self._n = 0

    def __call__(self):
        self._n += 1
        return jax.random.fold_in(self._key, self._n)


def conv_params(kg, in_ch, out_ch, ksize, stride=1):
    fan_in = ksize * ksize * in_ch
    # Unit-gain init (NOT He gain): keeps activations bounded through the many
    # residual additions so head exp()/sigmoid() stay finite.
    w = jax.random.normal(kg(), (ksize, ksize, in_ch, out_ch),
                          jnp.float32) * (1.0 / fan_in) ** 0.5
    # eval-mode BatchNorm folded: gamma=1, beta=0, mean=0, var=1, eps=1e-5
    eps = 1e-5
    scale = jnp.ones((out_ch,), jnp.float32) / jnp.sqrt(1.0 + eps)
    bias = jnp.zeros((out_ch,), jnp.float32)
    return dict(kind="conv", ksize=ksize, stride=stride,
                mm=pack_matmul(w.reshape(fan_in, out_ch), scale, bias))


def resblock_params(kg, ch, nblocks=1, shortcut=True):
    blocks = []
    for _ in range(nblocks):
        blocks.append((conv_params(kg, ch, ch // 2, 1, 1),
                       conv_params(kg, ch // 2, ch, 3, 1)))
    return dict(kind="res", blocks=blocks, shortcut=shortcut)


def head_params(kg, anch_mask, in_ch, stride):
    n_anchors = 4
    ones = lambda n: jnp.ones((n,), jnp.float32)
    zeros = lambda n: jnp.zeros((n,), jnp.float32)

    guide_w = jax.random.normal(kg(), (in_ch, 2 * n_anchors), jnp.float32) * 0.01
    guide = pack_matmul(guide_w, ones(2 * n_anchors), zeros(2 * n_anchors))

    off_w = jax.random.normal(kg(), (n_anchors, 2, 18), jnp.float32) * 0.01
    off_b = jnp.zeros((n_anchors, 18), jnp.float32)

    dconv_w = jax.random.normal(kg(), (3, 3, in_ch, in_ch),
                                jnp.float32) * (1.0 / (9 * in_ch)) ** 0.5
    dconv = pack_matmul(dconv_w.reshape(9 * in_ch, in_ch), ones(in_ch),
                        zeros(in_ch))

    head_w = jax.random.normal(kg(), (in_ch, n_anchors * N_CH), jnp.float32) * 0.01
    head = pack_matmul(head_w, ones(n_anchors * N_CH), zeros(n_anchors * N_CH))

    anchors = [ANCHORS[i] for i in anch_mask]
    return dict(kind="head", guide=guide, off_w=off_w, off_b=off_b,
                dconv=dconv, head=head, anchors=anchors, stride=stride)


def build_modules(seed=0):
    kg = KeyGen(seed)
    m = []
    m.append(conv_params(kg, 3, 32, 3, 1))          # 0
    m.append(conv_params(kg, 32, 64, 3, 2))         # 1
    m.append(resblock_params(kg, 64))               # 2
    m.append(conv_params(kg, 64, 128, 3, 2))        # 3
    m.append(resblock_params(kg, 128, 2))           # 4
    m.append(conv_params(kg, 128, 256, 3, 2))       # 5
    m.append(resblock_params(kg, 256, 8))           # 6
    m.append(conv_params(kg, 256, 512, 3, 2))       # 7
    m.append(resblock_params(kg, 512, 8))           # 8
    m.append(conv_params(kg, 512, 1024, 3, 2))      # 9
    m.append(resblock_params(kg, 1024, 4))          # 10
    m.append(resblock_params(kg, 1024, 1, shortcut=False))  # 11
    m.append(conv_params(kg, 1024, 512, 1, 1))      # 12
    m.append(dict(kind="spp"))                      # 13
    m.append(conv_params(kg, 2048, 512, 1, 1))      # 14
    m.append(conv_params(kg, 512, 1024, 3, 1))      # 15
    m.append(dict(kind="drop"))                     # 16 DropBlock(1, 1.0) == identity
    m.append(conv_params(kg, 1024, 512, 1, 1))      # 17
    m.append(conv_params(kg, 512, 1024, 3, 1))      # 18
    m.append(head_params(kg, [6, 7, 8], 1024, 32))  # 19
    m.append(conv_params(kg, 512, 256, 1, 1))       # 20
    m.append(dict(kind="up"))                       # 21
    m.append(conv_params(kg, 768, 256, 1, 1))       # 22
    m.append(conv_params(kg, 256, 512, 3, 1))       # 23
    m.append(dict(kind="drop"))                     # 24
    m.append(resblock_params(kg, 512, 1, shortcut=False))  # 25
    m.append(conv_params(kg, 512, 256, 1, 1))       # 26
    m.append(conv_params(kg, 256, 512, 3, 1))       # 27
    m.append(head_params(kg, [3, 4, 5], 512, 16))   # 28
    m.append(conv_params(kg, 256, 128, 1, 1))       # 29
    m.append(dict(kind="up"))                       # 30
    m.append(conv_params(kg, 384, 128, 1, 1))       # 31
    m.append(conv_params(kg, 128, 256, 3, 1))       # 32
    m.append(dict(kind="drop"))                     # 33
    m.append(resblock_params(kg, 256, 1, shortcut=False))  # 34
    m.append(conv_params(kg, 256, 128, 1, 1))       # 35
    m.append(conv_params(kg, 128, 256, 3, 1))       # 36
    m.append(head_params(kg, [0, 1, 2], 256, 8))    # 37
    return m


# ----------------------------------------------------------------------------
# Full YOLOv3 forward (mirrors YOLOv3.forward with fgvp=False, targets=None).
# ----------------------------------------------------------------------------
def yolov3_forward(modules, x_nchw):
    x = jnp.transpose(x_nchw.astype(jnp.float32), (0, 2, 3, 1))  # -> NHWC
    output, feature_output, boxes_output, route_layers = [], [], [], []
    for i, m in enumerate(modules):
        kind = m["kind"]
        if kind == "head":               # i in (19, 28, 37)
            feature_output.append(jnp.transpose(x, (0, 3, 1, 2)))  # NCHW like torch
            refined, box = run_head(m, x)
            boxes_output.append(box)
            output.append(refined)
            x = refined
        elif kind == "conv":
            x = run_conv(m, x)
        elif kind == "res":
            x = run_resblock(m, x)
        elif kind == "spp":
            x = run_spp(x)
        elif kind == "drop":
            pass                          # DropBlock(block_size=1, keep_prob=1.0)
        elif kind == "up":
            x = upsample2x(x)

        if i in (6, 8, 17, 26):
            route_layers.append(x)
        if i == 19:
            x = route_layers[2]
        if i == 28:
            x = route_layers[3]
        if i == 21:
            x = jnp.concatenate((x, route_layers[1]), axis=-1)  # NCHW dim=1
        if i == 30:
            x = jnp.concatenate((x, route_layers[0]), axis=-1)

    return jnp.concatenate(output, axis=1), feature_output, boxes_output


if __name__ == "__main__":
    key = jax.random.PRNGKey(0)
    # Small input consistent with the module: 3 input channels, spatial
    # divisible by 32 (head strides are 32 / 16 / 8).
    x = jax.random.normal(key, (1, 3, 64, 64), jnp.float32)  # NCHW, like PyTorch

    modules = build_modules(seed=0)
    out, feats, boxes = yolov3_forward(modules, x)

    out = jax.block_until_ready(out)
    for b in boxes:
        jax.block_until_ready(b)
    for ft in feats:
        jax.block_until_ready(ft)

    # 4 anchors * (2*2 + 4*4 + 8*8) grid cells = 336 boxes, 85 channels each.
    assert out.shape == (1, 4 * (2 * 2 + 4 * 4 + 8 * 8), N_CH), out.shape
    assert len(feats) == 3 and len(boxes) == 3
    assert boxes[0].shape == (1, 2 * 2, 4, N_CH)
    assert not bool(jnp.any(jnp.isnan(out)))
    print("KERNEL_OK")
</pallas_src>

<mosaic_0001>
module attributes {stable_mosaic.version = 11 : i64} {
  func.func @_mm_affine_act_kernel(%arg0: i32, %arg1: i32, %arg2: i32, %arg3: memref<512x128xbf16, #tpu.memory_space<vmem>>, %arg4: memref<128x128xbf16, #tpu.memory_space<vmem>>, %arg5: memref<1x128xf32, #tpu.memory_space<vmem>>, %arg6: memref<1x128xf32, #tpu.memory_space<vmem>>, %arg7: memref<512x128xf32, #tpu.memory_space<vmem>>, %arg8: memref<512x128xf32, #tpu.memory_space<vmem>>) attributes {dimension_semantics = [#tpu.dimension_semantics<parallel>, #tpu.dimension_semantics<parallel>, #tpu.dimension_semantics<arbitrary>], iteration_bounds = array<i64: 8, 1, 1>, scalar_prefetch = 0 : i64, scratch_operands = 1 : i64, tpu.core_type = #tpu.core_type<tc>, window_params = [{transform_indices = @transform_0, window_bounds = array<i64: 512, 128>}, {transform_indices = @transform_1, window_bounds = array<i64: 128, 128>}, {transform_indices = @transform_2, window_bounds = array<i64: 1, 128>}, {transform_indices = @transform_3, window_bounds = array<i64: 1, 128>}, {transform_indices = @transform_4, window_bounds = array<i64: 512, 128>}]} {
    %c0_i32 = arith.constant 0 : i32
    %0 = arith.cmpi eq, %arg2, %c0_i32 : i32
    %1 = arith.extui %0 : i1 to i32
    %c0_i32_0 = arith.constant 0 : i32
    %2 = arith.cmpi ne, %1, %c0_i32_0 : i32
    scf.if %2 {
      %cst_10 = arith.constant 0.000000e+00 : f32
      %12 = vector.broadcast %cst_10 : f32 to vector<512x128xf32>
      %c0_11 = arith.constant 0 : index
      %c0_12 = arith.constant 0 : index
      %13 = vector.load %arg8[%c0_11, %c0_12] : memref<512x128xf32, #tpu.memory_space<vmem>>, vector<512x128xf32>
      tpu.vector_store %arg8[%c0_11, %c0_12], %12 {strides = array<i32>} : memref<512x128xf32, #tpu.memory_space<vmem>>, vector<512x128xf32>,
    } else {
    }
    %c0 = arith.constant 0 : index
    %c0_1 = arith.constant 0 : index
    %3 = vector.load %arg8[%c0, %c0_1] : memref<512x128xf32, #tpu.memory_space<vmem>>, vector<512x128xf32>
    %c0_2 = arith.constant 0 : index
    %c0_3 = arith.constant 0 : index
    %4 = vector.load %arg3[%c0_2, %c0_3] : memref<512x128xbf16, #tpu.memory_space<vmem>>, vector<512x128xbf16>
    %c0_4 = arith.constant 0 : index
    %c0_5 = arith.constant 0 : index
    %5 = vector.load %arg4[%c0_4, %c0_5] : memref<128x128xbf16, #tpu.memory_space<vmem>>, vector<128x128xbf16>
    %cst = arith.constant dense<0.000000e+00> : vector<512x128xf32>
    %6 = tpu.matmul %4, %5, %cst {dimension_numbers = #tpu.dot_dimension_numbers<[1], [0], [0], [1], [0, 0, 1, 1], [], []>} : vector<512x128xbf16>, vector<128x128xbf16>, vector<512x128xf32> -> vector<512x128xf32>
    %7 = arith.addf %3, %6 : vector<512x128xf32>
    %c0_6 = arith.constant 0 : index
    %c0_7 = arith.constant 0 : index
    %8 = vector.load %arg8[%c0_6, %c0_7] : memref<512x128xf32, #tpu.memory_space<vmem>>, vector<512x128xf32>
    tpu.vector_store %arg8[%c0_6, %c0_7], %7 {strides = array<i32>} : memref<512x128xf32, #tpu.memory_space<vmem>>, vector<512x128xf32>,
    %c0_i32_8 = arith.constant 0 : i32
    %9 = arith.cmpi eq, %arg2, %c0_i32_8 : i32
    %10 = arith.extui %9 : i1 to i32
    %c0_i32_9 = arith.constant 0 : i32
    %11 = arith.cmpi ne, %10, %c0_i32_9 : i32
    scf.if %11 {
      %c0_10 = arith.constant 0 : index
      %c0_11 = arith.constant 0 : index
      %12 = vector.load %arg8[%c0_10, %c0_11] : memref<512x128xf32, #tpu.memory_space<vmem>>, vector<512x128xf32>
      %c0_12 = arith.constant 0 : index
      %c0_13 = arith.constant 0 : index
      %13 = vector.load %arg5[%c0_12, %c0_13] : memref<1x128xf32, #tpu.memory_space<vmem>>, vector<1x128xf32>
      %14 = vector.broadcast %13 : vector<1x128xf32> to vector<512x128xf32>
      %15 = arith.mulf %12, %14 : vector<512x128xf32>
      %c0_14 = arith.constant 0 : index
      %c0_15 = arith.constant 0 : index
      %16 = vector.load %arg6[%c0_14, %c0_15] : memref<1x128xf32, #tpu.memory_space<vmem>>, vector<1x128xf32>
      %17 = vector.broadcast %16 : vector<1x128xf32> to vector<512x128xf32>
      %18 = arith.addf %15, %17 : vector<512x128xf32>
      %cst_16 = arith.constant 0.000000e+00 : f32
      %19 = vector.broadcast %cst_16 : f32 to vector<512x128xf32>
      %20 = arith.cmpf ogt, %18, %19 : vector<512x128xf32>
      %cst_17 = arith.constant 1.000000e-01 : f32
      %21 = vector.broadcast %cst_17 : f32 to vector<512x128xf32>
      %22 = arith.mulf %21, %18 : vector<512x128xf32>
      %23 = arith.select %20, %18, %22 : vector<512x128xi1>, vector<512x128xf32>
      %c0_18 = arith.constant 0 : index
      %c0_19 = arith.constant 0 : index
      %24 = vector.load %arg7[%c0_18, %c0_19] : memref<512x128xf32, #tpu.memory_space<vmem>>, vector<512x128xf32>
      tpu.vector_store %arg7[%c0_18, %c0_19], %23 {strides = array<i32>} : memref<512x128xf32, #tpu.memory_space<vmem>>, vector<512x128xf32>,
    } else {
    }
    return
  }
  func.func @transform_0(%arg0: i32, %arg1: i32, %arg2: i32) -> (i32, i32) {
    %c0_i32 = arith.constant 0 : i32
    return %arg0, %arg2 : i32, i32
  }
  func.func @transform_1(%arg0: i32, %arg1: i32, %arg2: i32) -> (i32, i32) {
    %c0_i32 = arith.constant 0 : i32
    return %arg2, %arg1 : i32, i32
  }
  func.func @transform_2(%arg0: i32, %arg1: i32, %arg2: i32) -> (i32, i32) {
    %c0_i32 = arith.constant 0 : i32
    %c0_i32_0 = arith.constant 0 : i32
    return %c0_i32, %arg1 : i32, i32
  }
  func.func @transform_3(%arg0: i32, %arg1: i32, %arg2: i32) -> (i32, i32) {
    %c0_i32 = arith.constant 0 : i32
    %c0_i32_0 = arith.constant 0 : i32
    return %c0_i32, %arg1 : i32, i32
  }
  func.func @transform_4(%arg0: i32, %arg1: i32, %arg2: i32) -> (i32, i32) {
    %c0_i32 = arith.constant 0 : i32
    return %arg0, %arg1 : i32, i32
  }
}

</mosaic_0001>

<llo_original>
// kernel: _matmul_affine_act.1
$region0: #{_matmul_affine_act.1}
  #allocation0 [shape = 'u32[]', space=smem, size = 0x4, offset = 0x4, fixed_abs, tag = 'smem constant byte address 0x4 - core index']
  #allocation1 [shape = 'u32[144,128]{1,0:T(1,128)}', space=vmem, size = 0x12000, scoped, tag = 'internal scratch']
  #allocation2 [shape = 'f32[512,128]{1,0:T(8,128)}', space=vmem, size = 0x40000, scoped, tag = 'scratch operand']
  %s0 = inlined_call_operand.vmem [shape: bf16[4096,128], index: 0, kind: input, shape index: {}]
  %s1 = inlined_call_operand.vmem [shape: bf16[128,128], index: 1, kind: input, shape index: {}]
  %s2 = inlined_call_operand.vmem [shape: f32[1,128], index: 2, kind: input, shape index: {}]
  %s3 = inlined_call_operand.vmem [shape: f32[1,128], index: 3, kind: input, shape index: {}]
  %s4 = inlined_call_operand.vmem [shape: f32[4096,128], index: 4, kind: output, shape index: {}]
  %s5 = sld [smem:[#allocation0]]
  $region57: #{_matmul_affine_act.1} parent=0
    _
  %s7 = ssub.s32 1, %s5
  %s8 = scalar_select 0, %s7, %s5
  loop: start=0, step=1, limit=10
  $region2: #{_matmul_affine_act.1} parent=0 // loop_pre_header
    _
  $region3: #{_matmul_affine_act.1} parent=0 // loop_header
    %s10 = sphi 0, %s14
    %p11 = scmp.ge.s32.totalorder %s10, 10
    %s17 = sphi 0, %s36
    %s18 = sphi 0, %s32
    %s19 = sphi 0, %s28
    %s20 = sphi 0, %s17
    %s21 = sphi 0, %s18
    %s22 = sphi 0, %s19
    %s23 = sphi 0, %s20
    %s24 = sphi 0, %s21
    %s25 = sphi 0, %s22
    %s41 = sphi 0, %s43
    %s44 = sphi 0, %s41
    %s45 = sphi 0, %s44
    %s61 = sphi 0, %s45
    %s69 = sphi 0, %s71
    %s72 = sphi 0, %s69
    %s73 = sphi 0, %s72
    %s89 = sphi 0, %s73
    %s95 = sphi 0, %s97
    %s98 = sphi 0, %s95
    %s99 = sphi 0, %s98
    %s115 = sphi 0, %s99
    %s121 = sphi 0, %s123
    %s124 = sphi 0, %s121
    %s125 = sphi 0, %s124
    %s141 = sphi 0, %s125
    %s149 = sphi 0, %s151
    %s152 = sphi 0, %s149
    %s153 = sphi 0, %s152
    %s169 = sphi 0, %s153
  $region4: #{_matmul_affine_act.1} parent=0 // loop_header_branch
    %13 = sbr.rel (%p11) target = $region8
  $region5: #{_matmul_affine_act.1} parent=0 // loop_body
    %s15 = ssub.s32 %s10, 1
    %s16 = ssub.s32 %s10, 2
    %s26 = sadd.s32 1, %s19
    %p27 = scmp.ge.s32.totalorder %s26, 1
    %s28 = scalar_select %p27, 0, %s26
    %s29 = sadd.s32 1, %s18
    %s30 = scalar_select %p27, %s29, %s18
    %p31 = scmp.ge.s32.totalorder %s30, 1
    %s32 = scalar_select %p31, 0, %s30
    %s33 = sadd.s32 1, %s17
    %s34 = scalar_select %p31, %s33, %s17
    %p35 = scmp.ge.s32.totalorder %s34, 8
    %s36 = scalar_select %p35, 0, %s34
    %s37 = ssub.s32 %s17, %s36
    %s38 = ssub.s32 %s19, %s28
    %s39 = sor.u32 %s37, %s38
    %p40 = scmp.eq.s32.totalorder %s39, 0
    %s42 = sadd.s32 %s41, 1
    %s43 = scalar_select %p40, %s41, %s42
    %p46 = pneg %p40
    %p47 = scmp.eq.s32.totalorder %s10, 7
    %p48 = por %p46, %p47
    %p49 = scmp.ne.s32.totalorder %s41, %s44
    %p50 = scmp.eq.s32.totalorder %s10, 0
    %p51 = por %p49, %p50
    %p52 = scmp.ne.s32.totalorder %s41, %s44
    %p53 = scmp.eq.s32.totalorder %s15, 7
    %p54 = por %p52, %p53
    %p55 = scmp.ne.s32.totalorder %s44, %s45
    %p56 = scmp.eq.s32.totalorder %s15, 0
    %p57 = por %p55, %p56
    %p58 = scmp.ne.s32.totalorder %s44, %s45
    %p59 = scmp.eq.s32.totalorder %s16, 7
    %p60 = por %p58, %p59
    %p62 = scmp.ne.s32.totalorder %s45, %s61
    %p63 = scmp.eq.s32.totalorder %s16, 0
    %p64 = por %p62, %p63
    %s65 = ssub.s32 %s19, %s28
    %s66 = ssub.s32 %s18, %s32
    %s67 = sor.u32 %s65, %s66
    %p68 = scmp.eq.s32.totalorder %s67, 0
    %s70 = sadd.s32 %s69, 1
    %s71 = scalar_select %p68, %s69, %s70
    %p74 = pneg %p68
    %p75 = scmp.eq.s32.totalorder %s10, 7
    %p76 = por %p74, %p75
    %p77 = scmp.ne.s32.totalorder %s69, %s72
    %p78 = scmp.eq.s32.totalorder %s10, 0
    %p79 = por %p77, %p78
    %p80 = scmp.ne.s32.totalorder %s69, %s72
    %p81 = scmp.eq.s32.totalorder %s15, 7
    %p82 = por %p80, %p81
    %p83 = scmp.ne.s32.totalorder %s72, %s73
    %p84 = scmp.eq.s32.totalorder %s15, 0
    %p85 = por %p83, %p84
    %p86 = scmp.ne.s32.totalorder %s72, %s73
    %p87 = scmp.eq.s32.totalorder %s16, 7
    %p88 = por %p86, %p87
    %p90 = scmp.ne.s32.totalorder %s73, %s89
    %p91 = scmp.eq.s32.totalorder %s16, 0
    %p92 = por %p90, %p91
    %s93 = ssub.s32 %s18, %s32
    %p94 = scmp.eq.s32.totalorder %s93, 0
    %s96 = sadd.s32 %s95, 1
    %s97 = scalar_select %p94, %s95, %s96
    %p100 = pneg %p94
    %p101 = scmp.eq.s32.totalorder %s10, 7
    %p102 = por %p100, %p101
    %p103 = scmp.ne.s32.totalorder %s95, %s98
    %p104 = scmp.eq.s32.totalorder %s10, 0
    %p105 = por %p103, %p104
    %p106 = scmp.ne.s32.totalorder %s95, %s98
    %p107 = scmp.eq.s32.totalorder %s15, 7
    %p108 = por %p106, %p107
    %p109 = scmp.ne.s32.totalorder %s98, %s99
    %p110 = scmp.eq.s32.totalorder %s15, 0
    %p111 = por %p109, %p110
    %p112 = scmp.ne.s32.totalorder %s98, %s99
    %p113 = scmp.eq.s32.totalorder %s16, 7
    %p114 = por %p112, %p113
    %p116 = scmp.ne.s32.totalorder %s99, %s115
    %p117 = scmp.eq.s32.totalorder %s16, 0
    %p118 = por %p116, %p117
    %s119 = ssub.s32 %s18, %s32
    %p120 = scmp.eq.s32.totalorder %s119, 0
    %s122 = sadd.s32 %s121, 1
    %s123 = scalar_select %p120, %s121, %s122
    %p126 = pneg %p120
    %p127 = scmp.eq.s32.totalorder %s10, 7
    %p128 = por %p126, %p127
    %p129 = scmp.ne.s32.totalorder %s121, %s124
    %p130 = scmp.eq.s32.totalorder %s10, 0
    %p131 = por %p129, %p130
    %p132 = scmp.ne.s32.totalorder %s121, %s124
    %p133 = scmp.eq.s32.totalorder %s15, 7
    %p134 = por %p132, %p133
    %p135 = scmp.ne.s32.totalorder %s124, %s125
    %p136 = scmp.eq.s32.totalorder %s15, 0
    %p137 = por %p135, %p136
    %p138 = scmp.ne.s32.totalorder %s124, %s125
    %p139 = scmp.eq.s32.totalorder %s16, 7
    %p140 = por %p138, %p139
    %p142 = scmp.ne.s32.totalorder %s125, %s141
    %p143 = scmp.eq.s32.totalorder %s16, 0
    %p144 = por %p142, %p143
    %s145 = ssub.s32 %s17, %s36
    %s146 = ssub.s32 %s18, %s32
    %s147 = sor.u32 %s145, %s146
    %p148 = scmp.eq.s32.totalorder %s147, 0
    %s150 = sadd.s32 %s149, 1
    %s151 = scalar_select %p148, %s149, %s150
    %p154 = pneg %p148
    %p155 = scmp.eq.s32.totalorder %s10, 7
    %p156 = por %p154, %p155
    %p157 = scmp.ne.s32.totalorder %s149, %s152
    %p158 = scmp.eq.s32.totalorder %s10, 0
    %p159 = por %p157, %p158
    %p160 = scmp.ne.s32.totalorder %s149, %s152
    %p161 = scmp.eq.s32.totalorder %s15, 7
    %p162 = por %p160, %p161
    %p163 = scmp.ne.s32.totalorder %s152, %s153
    %p164 = scmp.eq.s32.totalorder %s15, 0
    %p165 = por %p163, %p164
    %p166 = scmp.ne.s32.totalorder %s152, %s153
    %p167 = scmp.eq.s32.totalorder %s16, 7
    %p168 = por %p166, %p167
    %p170 = scmp.ne.s32.totalorder %s153, %s169
    %p171 = scmp.eq.s32.totalorder %s16, 0
    %p172 = por %p170, %p171
    %p173 = scmp.le.s32.totalorder 1, %s10
    %p174 = scmp.lt.s32.totalorder %s10, 9
    %p175 = pnand %p173, %p174
    %p176 = pneg %p175
    // Predicated region
    $region9: #{_matmul_affine_act.1} parent=5 // pred_check
      _
    $region10: #{_matmul_affine_act.1} parent=5 // pred_check_branch
      %178 = sbr.rel (%p175) target = $region12
    $region11: #{_matmul_affine_act.1} parent=5 // pred_region
      %s179 = ssub.s32 %s10, 1
      // Predicated region
      $region13: #{_matmul_affine_act.1} parent=11 // pred_check
        %p180 = pneg %p85
      $region14: #{_matmul_affine_act.1} parent=11 // pred_check_branch
        %182 = sbr.rel (%p180) target = $region16
      $region15: #{_matmul_affine_act.1} parent=11 // pred_region
        %s183 = smul.u32 16, %s22
        %p184 = scmp.lt.s32.totalorder %s183, 15
        %s185 = scalar_select %p184, %s183, 15
        %p186 = scmp.lt.s32.totalorder %s21, 0
        %s187 = scalar_select %p186, %s21, 0
        %s188 = sadd.s32 %s187, %s185
        %s189 = smul.addr %s188, 4
        %s190 = scalar_lea.vmem %s1, %s189
        %s191 = smul.u32 16, %s22
      $region16: #{_matmul_affine_act.1} parent=11 // pred_fallthru
        _
      // Predicated region
      $region17: #{_matmul_affine_act.1} parent=11 // pred_check
        %p192 = pneg %p111
      $region18: #{_matmul_affine_act.1} parent=11 // pred_check_branch
        %194 = sbr.rel (%p192) target = $region20
      $region19: #{_matmul_affine_act.1} parent=11 // pred_region
        %p195 = scmp.lt.s32.totalorder %s21, 0
        %s196 = scalar_select %p195, %s21, 0
        %s197 = scalar_lea.vmem %s2, %s196
      $region20: #{_matmul_affine_act.1} parent=11 // pred_fallthru
        _
      // Predicated region
      $region21: #{_matmul_affine_act.1} parent=11 // pred_check
        %p198 = pneg %p137
      $region22: #{_matmul_affine_act.1} parent=11 // pred_check_branch
        %200 = sbr.rel (%p198) target = $region24
      $region23: #{_matmul_affine_act.1} parent=11 // pred_region
        %p201 = scmp.lt.s32.totalorder %s21, 0
        %s202 = scalar_select %p201, %s21, 0
        %s203 = scalar_lea.vmem %s3, %s202
      $region24: #{_matmul_affine_act.1} parent=11 // pred_fallthru
        _
    $region12: #{_matmul_affine_act.1} parent=5 // pred_fallthru
      _
    %p204 = scmp.lt.s32.totalorder %s10, 8
    // Predicated region
    $region25: #{_matmul_affine_act.1} parent=5 // pred_check
      %p205 = pneg %p204
    $region26: #{_matmul_affine_act.1} parent=5 // pred_check_branch
      %207 = sbr.rel (%p205) target = $region28
    $region27: #{_matmul_affine_act.1} parent=5 // pred_region
      // Predicated region
      $region29: #{_matmul_affine_act.1} parent=27 // pred_check
        %p208 = pneg %p51
      $region30: #{_matmul_affine_act.1} parent=27 // pred_check_branch
        %210 = sbr.rel (%p208) target = $region32
      $region31: #{_matmul_affine_act.1} parent=27 // pred_region
        %s211 = smul.u32 64, %s17
        %p212 = scmp.lt.s32.totalorder %s211, 511
        %s213 = scalar_select %p212, %s211, 511
        %p214 = scmp.lt.s32.totalorder %s19, 0
        %s215 = scalar_select %p214, %s19, 0
        %s216 = sadd.s32 %s215, %s213
        %s217 = smul.addr %s216, 4
        %s218 = scalar_lea.vmem %s0, %s217
        %s219 = smul.u32 64, %s17
      $region32: #{_matmul_affine_act.1} parent=27 // pred_fallthru
        _
    $region28: #{_matmul_affine_act.1} parent=5 // pred_fallthru
      _
    %p220 = scmp.le.s32.totalorder 1, %s10
    %p221 = scmp.lt.s32.totalorder %s10, 9
    %p222 = pnand %p220, %p221
    %p223 = pneg %p222
    // Predicated region
    $region33: #{_matmul_affine_act.1} parent=5 // pred_check
      _
    $region34: #{_matmul_affine_act.1} parent=5 // pred_check_branch
      %225 = sbr.rel (%p222) target = $region36
    $region35: #{_matmul_affine_act.1} parent=5 // pred_region
      %s226 = ssub.s32 %s10, 1
      %s227 = smul.u32 64, %s20
      %p228 = scmp.lt.s32.totalorder %s227, 511
      %s229 = scalar_select %p228, %s227, 511
      %p230 = scmp.lt.s32.totalorder %s22, 0
      %s231 = scalar_select %p230, %s22, 0
      %s232 = sadd.s32 %s231, %s229
      %s233 = smul.addr %s232, 4
      %s234 = scalar_lea.vmem %s0, %s233
      %p235 = pneg %p57
      %p236 = pneg %p54
      %s237 = smul.u32 16, %s22
      %p238 = scmp.lt.s32.totalorder %s237, 15
      %s239 = scalar_select %p238, %s237, 15
      %p240 = scmp.lt.s32.totalorder %s21, 0
      %s241 = scalar_select %p240, %s21, 0
      %s242 = sadd.s32 %s241, %s239
      %s243 = smul.addr %s242, 4
      %s244 = scalar_lea.vmem %s1, %s243
      %p245 = pneg %p85
      %p246 = pneg %p82
      %p247 = scmp.lt.s32.totalorder %s21, 0
      %s248 = scalar_select %p247, %s21, 0
      %s249 = scalar_lea.vmem %s2, %s248
      %p250 = pneg %p111
      %p251 = pneg %p108
      %p252 = scmp.lt.s32.totalorder %s21, 0
      %s253 = scalar_select %p252, %s21, 0
      %s254 = scalar_lea.vmem %s3, %s253
      %p255 = pneg %p137
      %p256 = pneg %p134
      %p257 = pneg %p165
      %p258 = pneg %p162
      %s259 = smul.u32 64, %s20
      %p260 = scmp.lt.s32.totalorder %s259, 511
      %s261 = scalar_select %p260, %s259, 511
      %p262 = scmp.lt.s32.totalorder %s21, 0
      %s263 = scalar_select %p262, %s21, 0
      %s264 = sadd.s32 %s263, %s261
      %s265 = smul.addr %s264, 8
      %s266 = scalar_lea.vmem %s4, %s265
      %s267 = smul.u32 64, %s20
      %p268 = scmp.lt.s32.totalorder %s267, 511
      %s269 = scalar_select %p268, %s267, 511
      %p270 = scmp.lt.s32.totalorder %s22, 0
      %s271 = scalar_select %p270, %s22, 0
      %s272 = sadd.s32 %s271, %s269
      %s273 = smul.addr %s272, 4
      %s274 = scalar_lea.vmem %s0, %s273
      %s275 = smul.u32 64, %s20
      %s276 = smul.u32 16, %s22
      %p277 = scmp.lt.s32.totalorder %s276, 15
      %s278 = scalar_select %p277, %s276, 15
      %p279 = scmp.lt.s32.totalorder %s21, 0
      %s280 = scalar_select %p279, %s21, 0
      %s281 = sadd.s32 %s280, %s278
      %s282 = smul.addr %s281, 4
      %s283 = scalar_lea.vmem %s1, %s282
      %s284 = smul.u32 16, %s22
      %p285 = scmp.lt.s32.totalorder %s21, 0
      %s286 = scalar_select %p285, %s21, 0
      %s287 = scalar_lea.vmem %s2, %s286
      %p288 = scmp.lt.s32.totalorder %s21, 0
      %s289 = scalar_select %p288, %s21, 0
      %s290 = scalar_lea.vmem %s3, %s289
      %s291 = smul.u32 64, %s20
      %p292 = scmp.lt.s32.totalorder %s291, 511
      %s293 = scalar_select %p292, %s291, 511
      %p294 = scmp.lt.s32.totalorder %s21, 0
      %s295 = scalar_select %p294, %s21, 0
      %s296 = sadd.s32 %s295, %s293
      %s297 = smul.addr %s296, 8
      %s298 = scalar_lea.vmem %s4, %s297
      %s299 = smul.u32 64, %s20
      %p301 = scmp.eq.s32.totalorder %s22, 0
      // Predicated region
      $region37: #{_matmul_affine_act.1} parent=35 // pred_check
        %p302 = pneg %p301
      $region38: #{_matmul_affine_act.1} parent=35 // pred_check_branch
        %304 = sbr.rel (%p302) target = $region40
      $region39: #{_matmul_affine_act.1} parent=35 // pred_region
        %305 = vst [vmem:[#allocation2] sm:$0xff] 0.0
        %306 = vst [vmem:[#allocation2 + $0x8] sm:$0xff] 0.0
        %307 = vst [vmem:[#allocation2 + $0x10] sm:$0xff] 0.0
        %308 = vst [vmem:[#allocation2 + $0x18] sm:$0xff] 0.0
        %309 = vst [vmem:[#allocation2 + $0x20] sm:$0xff] 0.0
        %310 = vst [vmem:[#allocation2 + $0x28] sm:$0xff] 0.0
        %311 = vst [vmem:[#allocation2 + $0x30] sm:$0xff] 0.0
        %312 = vst [vmem:[#allocation2 + $0x38] sm:$0xff] 0.0
        %313 = vst [vmem:[#allocation2 + $0x40] sm:$0xff] 0.0
        %314 = vst [vmem:[#allocation2 + $0x48] sm:$0xff] 0.0
        %315 = vst [vmem:[#allocation2 + $0x50] sm:$0xff] 0.0
        %316 = vst [vmem:[#allocation2 + $0x58] sm:$0xff] 0.0
        %317 = vst [vmem:[#allocation2 + $0x60] sm:$0xff] 0.0
        %318 = vst [vmem:[#allocation2 + $0x68] sm:$0xff] 0.0
        %319 = vst [vmem:[#allocation2 + $0x70] sm:$0xff] 0.0
        %320 = vst [vmem:[#allocation2 + $0x78] sm:$0xff] 0.0
        %321 = vst [vmem:[#allocation2 + $0x80] sm:$0xff] 0.0
        %322 = vst [vmem:[#allocation2 + $0x88] sm:$0xff] 0.0
        %323 = vst [vmem:[#allocation2 + $0x90] sm:$0xff] 0.0
        %324 = vst [vmem:[#allocation2 + $0x98] sm:$0xff] 0.0
        %325 = vst [vmem:[#allocation2 + $0xa0] sm:$0xff] 0.0
        %326 = vst [vmem:[#allocation2 + $0xa8] sm:$0xff] 0.0
        %327 = vst [vmem:[#allocation2 + $0xb0] sm:$0xff] 0.0
        %328 = vst [vmem:[#allocation2 + $0xb8] sm:$0xff] 0.0
        %329 = vst [vmem:[#allocation2 + $0xc0] sm:$0xff] 0.0
        %330 = vst [vmem:[#allocation2 + $0xc8] sm:$0xff] 0.0
        %331 = vst [vmem:[#allocation2 + $0xd0] sm:$0xff] 0.0
        %332 = vst [vmem:[#allocation2 + $0xd8] sm:$0xff] 0.0
        %333 = vst [vmem:[#allocation2 + $0xe0] sm:$0xff] 0.0
        %334 = vst [vmem:[#allocation2 + $0xe8] sm:$0xff] 0.0
        %335 = vst [vmem:[#allocation2 + $0xf0] sm:$0xff] 0.0
        %336 = vst [vmem:[#allocation2 + $0xf8] sm:$0xff] 0.0
        %337 = vst [vmem:[#allocation2 + $0x100] sm:$0xff] 0.0
        %338 = vst [vmem:[#allocation2 + $0x108] sm:$0xff] 0.0
        %339 = vst [vmem:[#allocation2 + $0x110] sm:$0xff] 0.0
        %340 = vst [vmem:[#allocation2 + $0x118] sm:$0xff] 0.0
        %341 = vst [vmem:[#allocation2 + $0x120] sm:$0xff] 0.0
        %342 = vst [vmem:[#allocation2 + $0x128] sm:$0xff] 0.0
        %343 = vst [vmem:[#allocation2 + $0x130] sm:$0xff] 0.0
        %344 = vst [vmem:[#allocation2 + $0x138] sm:$0xff] 0.0
        %345 = vst [vmem:[#allocation2 + $0x140] sm:$0xff] 0.0
        %346 = vst [vmem:[#allocation2 + $0x148] sm:$0xff] 0.0
        %347 = vst [vmem:[#allocation2 + $0x150] sm:$0xff] 0.0
        %348 = vst [vmem:[#allocation2 + $0x158] sm:$0xff] 0.0
        %349 = vst [vmem:[#allocation2 + $0x160] sm:$0xff] 0.0
        %350 = vst [vmem:[#allocation2 + $0x168] sm:$0xff] 0.0
        %351 = vst [vmem:[#allocation2 + $0x170] sm:$0xff] 0.0
        %352 = vst [vmem:[#allocation2 + $0x178] sm:$0xff] 0.0
        %353 = vst [vmem:[#allocation2 + $0x180] sm:$0xff] 0.0
        %354 = vst [vmem:[#allocation2 + $0x188] sm:$0xff] 0.0
        %355 = vst [vmem:[#allocation2 + $0x190] sm:$0xff] 0.0
        %356 = vst [vmem:[#allocation2 + $0x198] sm:$0xff] 0.0
        %357 = vst [vmem:[#allocation2 + $0x1a0] sm:$0xff] 0.0
        %358 = vst [vmem:[#allocation2 + $0x1a8] sm:$0xff] 0.0
        %359 = vst [vmem:[#allocation2 + $0x1b0] sm:$0xff] 0.0
        %360 = vst [vmem:[#allocation2 + $0x1b8] sm:$0xff] 0.0
        %361 = vst [vmem:[#allocation2 + $0x1c0] sm:$0xff] 0.0
        %362 = vst [vmem:[#allocation2 + $0x1c8] sm:$0xff] 0.0
        %363 = vst [vmem:[#allocation2 + $0x1d0] sm:$0xff] 0.0
        %364 = vst [vmem:[#allocation2 + $0x1d8] sm:$0xff] 0.0
        %365 = vst [vmem:[#allocation2 + $0x1e0] sm:$0xff] 0.0
        %366 = vst [vmem:[#allocation2 + $0x1e8] sm:$0xff] 0.0
        %367 = vst [vmem:[#allocation2 + $0x1f0] sm:$0xff] 0.0
        %368 = vst [vmem:[#allocation2 + $0x1f8] sm:$0xff] 0.0
      $region40: #{_matmul_affine_act.1} parent=35 // pred_fallthru
        _
      %v369 = vld [vmem:[#allocation2] sm:$0xff]
      %v370 = vld [vmem:[#allocation2 + $0x8] sm:$0xff]
      %v371 = vld [vmem:[#allocation2 + $0x10] sm:$0xff]
      %v372 = vld [vmem:[#allocation2 + $0x18] sm:$0xff]
      %v373 = vld [vmem:[#allocation2 + $0x20] sm:$0xff]
      %v374 = vld [vmem:[#allocation2 + $0x28] sm:$0xff]
      %v375 = vld [vmem:[#allocation2 + $0x30] sm:$0xff]
      %v376 = vld [vmem:[#allocation2 + $0x38] sm:$0xff]
      %v377 = vld [vmem:[#allocation2 + $0x40] sm:$0xff]
      %v378 = vld [vmem:[#allocation2 + $0x48] sm:$0xff]
      %v379 = vld [vmem:[#allocation2 + $0x50] sm:$0xff]
      %v380 = vld [vmem:[#allocation2 + $0x58] sm:$0xff]
      %v381 = vld [vmem:[#allocation2 + $0x60] sm:$0xff]
      %v382 = vld [vmem:[#allocation2 + $0x68] sm:$0xff]
      %v383 = vld [vmem:[#allocation2 + $0x70] sm:$0xff]
      %v384 = vld [vmem:[#allocation2 + $0x78] sm:$0xff]
      %v385 = vld [vmem:[#allocation2 + $0x80] sm:$0xff]
      %v386 = vld [vmem:[#allocation2 + $0x88] sm:$0xff]
      %v387 = vld [vmem:[#allocation2 + $0x90] sm:$0xff]
      %v388 = vld [vmem:[#allocation2 + $0x98] sm:$0xff]
      %v389 = vld [vmem:[#allocation2 + $0xa0] sm:$0xff]
      %v390 = vld [vmem:[#allocation2 + $0xa8] sm:$0xff]
      %v391 = vld [vmem:[#allocation2 + $0xb0] sm:$0xff]
      %v392 = vld [vmem:[#allocation2 + $0xb8] sm:$0xff]
      %v393 = vld [vmem:[#allocation2 + $0xc0] sm:$0xff]
      %v394 = vld [vmem:[#allocation2 + $0xc8] sm:$0xff]
      %v395 = vld [vmem:[#allocation2 + $0xd0] sm:$0xff]
      %v396 = vld [vmem:[#allocation2 + $0xd8] sm:$0xff]
      %v397 = vld [vmem:[#allocation2 + $0xe0] sm:$0xff]
      %v398 = vld [vmem:[#allocation2 + $0xe8] sm:$0xff]
      %v399 = vld [vmem:[#allocation2 + $0xf0] sm:$0xff]
      %v400 = vld [vmem:[#allocation2 + $0xf8] sm:$0xff]
      %v401 = vld [vmem:[#allocation2 + $0x100] sm:$0xff]
      %v402 = vld [vmem:[#allocation2 + $0x108] sm:$0xff]
      %v403 = vld [vmem:[#allocation2 + $0x110] sm:$0xff]
      %v404 = vld [vmem:[#allocation2 + $0x118] sm:$0xff]
      %v405 = vld [vmem:[#allocation2 + $0x120] sm:$0xff]
      %v406 = vld [vmem:[#allocation2 + $0x128] sm:$0xff]
      %v407 = vld [vmem:[#allocation2 + $0x130] sm:$0xff]
      %v408 = vld [vmem:[#allocation2 + $0x138] sm:$0xff]
      %v409 = vld [vmem:[#allocation2 + $0x140] sm:$0xff]
      %v410 = vld [vmem:[#allocation2 + $0x148] sm:$0xff]
      %v411 = vld [vmem:[#allocation2 + $0x150] sm:$0xff]
      %v412 = vld [vmem:[#allocation2 + $0x158] sm:$0xff]
      %v413 = vld [vmem:[#allocation2 + $0x160] sm:$0xff]
      %v414 = vld [vmem:[#allocation2 + $0x168] sm:$0xff]
      %v415 = vld [vmem:[#allocation2 + $0x170] sm:$0xff]
      %v416 = vld [vmem:[#allocation2 + $0x178] sm:$0xff]
      %v417 = vld [vmem:[#allocation2 + $0x180] sm:$0xff]
      %v418 = vld [vmem:[#allocation2 + $0x188] sm:$0xff]
      %v419 = vld [vmem:[#allocation2 + $0x190] sm:$0xff]
      %v420 = vld [vmem:[#allocation2 + $0x198] sm:$0xff]
      %v421 = vld [vmem:[#allocation2 + $0x1a0] sm:$0xff]
      %v422 = vld [vmem:[#allocation2 + $0x1a8] sm:$0xff]
      %v423 = vld [vmem:[#allocation2 + $0x1b0] sm:$0xff]
      %v424 = vld [vmem:[#allocation2 + $0x1b8] sm:$0xff]
      %v425 = vld [vmem:[#allocation2 + $0x1c0] sm:$0xff]
      %v426 = vld [vmem:[#allocation2 + $0x1c8] sm:$0xff]
      %v427 = vld [vmem:[#allocation2 + $0x1d0] sm:$0xff]
      %v428 = vld [vmem:[#allocation2 + $0x1d8] sm:$0xff]
      %v429 = vld [vmem:[#allocation2 + $0x1e0] sm:$0xff]
      %v430 = vld [vmem:[#allocation2 + $0x1e8] sm:$0xff]
      %v431 = vld [vmem:[#allocation2 + $0x1f0] sm:$0xff]
      %v432 = vld [vmem:[#allocation2 + $0x1f8] sm:$0xff]
      %v433 = vld [vmem:[%s274] sm:$0xf]
      %v434 = vld [vmem:[%s274 + $0x4] sm:$0xf]
      %v435 = vld [vmem:[%s274 + $0x8] sm:$0xf]
      %v436 = vld [vmem:[%s274 + $0xc] sm:$0xf]
      %v437 = vld [vmem:[%s274 + $0x10] sm:$0xf]
      %v438 = vld [vmem:[%s274 + $0x14] sm:$0xf]
      %v439 = vld [vmem:[%s274 + $0x18] sm:$0xf]
      %v440 = vld [vmem:[%s274 + $0x1c] sm:$0xf]
      %v441 = vld [vmem:[%s274 + $0x20] sm:$0xf]
      %v442 = vld [vmem:[%s274 + $0x24] sm:$0xf]
      %v443 = vld [vmem:[%s274 + $0x28] sm:$0xf]
      %v444 = vld [vmem:[%s274 + $0x2c] sm:$0xf]
      %v445 = vld [vmem:[%s274 + $0x30] sm:$0xf]
      %v446 = vld [vmem:[%s274 + $0x34] sm:$0xf]
      %v447 = vld [vmem:[%s274 + $0x38] sm:$0xf]
      %v448 = vld [vmem:[%s274 + $0x3c] sm:$0xf]
      %v449 = vld [vmem:[%s274 + $0x40] sm:$0xf]
      %v450 = vld [vmem:[%s274 + $0x44] sm:$0xf]
      %v451 = vld [vmem:[%s274 + $0x48] sm:$0xf]
      %v452 = vld [vmem:[%s274 + $0x4c] sm:$0xf]
      %v453 = vld [vmem:[%s274 + $0x50] sm:$0xf]
      %v454 = vld [vmem:[%s274 + $0x54] sm:$0xf]
      %v455 = vld [vmem:[%s274 + $0x58] sm:$0xf]
      %v456 = vld [vmem:[%s274 + $0x5c] sm:$0xf]
      %v457 = vld [vmem:[%s274 + $0x60] sm:$0xf]
      %v458 = vld [vmem:[%s274 + $0x64] sm:$0xf]
      %v459 = vld [vmem:[%s274 + $0x68] sm:$0xf]
      %v460 = vld [vmem:[%s274 + $0x6c] sm:$0xf]
      %v461 = vld [vmem:[%s274 + $0x70] sm:$0xf]
      %v462 = vld [vmem:[%s274 + $0x74] sm:$0xf]
      %v463 = vld [vmem:[%s274 + $0x78] sm:$0xf]
      %v464 = vld [vmem:[%s274 + $0x7c] sm:$0xf]
      %v465 = vld [vmem:[%s274 + $0x80] sm:$0xf]
      %v466 = vld [vmem:[%s274 + $0x84] sm:$0xf]
      %v467 = vld [vmem:[%s274 + $0x88] sm:$0xf]
      %v468 = vld [vmem:[%s274 + $0x8c] sm:$0xf]
      %v469 = vld [vmem:[%s274 + $0x90] sm:$0xf]
      %v470 = vld [vmem:[%s274 + $0x94] sm:$0xf]
      %v471 = vld [vmem:[%s274 + $0x98] sm:$0xf]
      %v472 = vld [vmem:[%s274 + $0x9c] sm:$0xf]
      %v473 = vld [vmem:[%s274 + $0xa0] sm:$0xf]
      %v474 = vld [vmem:[%s274 + $0xa4] sm:$0xf]
      %v475 = vld [vmem:[%s274 + $0xa8] sm:$0xf]
      %v476 = vld [vmem:[%s274 + $0xac] sm:$0xf]
      %v477 = vld [vmem:[%s274 + $0xb0] sm:$0xf]
      %v478 = vld [vmem:[%s274 + $0xb4] sm:$0xf]
      %v479 = vld [vmem:[%s274 + $0xb8] sm:$0xf]
      %v480 = vld [vmem:[%s274 + $0xbc] sm:$0xf]
      %v481 = vld [vmem:[%s274 + $0xc0] sm:$0xf]
      %v482 = vld [vmem:[%s274 + $0xc4] sm:$0xf]
      %v483 = vld [vmem:[%s274 + $0xc8] sm:$0xf]
      %v484 = vld [vmem:[%s274 + $0xcc] sm:$0xf]
      %v485 = vld [vmem:[%s274 + $0xd0] sm:$0xf]
      %v486 = vld [vmem:[%s274 + $0xd4] sm:$0xf]
      %v487 = vld [vmem:[%s274 + $0xd8] sm:$0xf]
      %v488 = vld [vmem:[%s274 + $0xdc] sm:$0xf]
      %v489 = vld [vmem:[%s274 + $0xe0] sm:$0xf]
      %v490 = vld [vmem:[%s274 + $0xe4] sm:$0xf]
      %v491 = vld [vmem:[%s274 + $0xe8] sm:$0xf]
      %v492 = vld [vmem:[%s274 + $0xec] sm:$0xf]
      %v493 = vld [vmem:[%s274 + $0xf0] sm:$0xf]
      %v494 = vld [vmem:[%s274 + $0xf4] sm:$0xf]
      %v495 = vld [vmem:[%s274 + $0xf8] sm:$0xf]
      %v496 = vld [vmem:[%s274 + $0xfc] sm:$0xf]
      %v497 = vld [vmem:[%s283] sm:$0xf]
      %v498 = vld [vmem:[%s283 + $0x4] sm:$0xf]
      %v499 = vld [vmem:[%s283 + $0x8] sm:$0xf]
      %v500 = vld [vmem:[%s283 + $0xc] sm:$0xf]
      %v501 = vld [vmem:[%s283 + $0x10] sm:$0xf]
      %v502 = vld [vmem:[%s283 + $0x14] sm:$0xf]
      %v503 = vld [vmem:[%s283 + $0x18] sm:$0xf]
      %v504 = vld [vmem:[%s283 + $0x1c] sm:$0xf]
      %v505 = vld [vmem:[%s283 + $0x20] sm:$0xf]
      %v506 = vld [vmem:[%s283 + $0x24] sm:$0xf]
      %v507 = vld [vmem:[%s283 + $0x28] sm:$0xf]
      %v508 = vld [vmem:[%s283 + $0x2c] sm:$0xf]
      %v509 = vld [vmem:[%s283 + $0x30] sm:$0xf]
      %v510 = vld [vmem:[%s283 + $0x34] sm:$0xf]
      %v511 = vld [vmem:[%s283 + $0x38] sm:$0xf]
      %v512 = vld [vmem:[%s283 + $0x3c] sm:$0xf]
      %v577 = vunpack.c.l.b16 %v433
      %v578 = vunpack.c.l.b16 %v434
      %v579 = vunpack.c.l.b16 %v435
      %v580 = vunpack.c.l.b16 %v436
      %v581 = vunpack.c.l.b16 %v437
      %v582 = vunpack.c.l.b16 %v438
      %v583 = vunpack.c.l.b16 %v439
      %v584 = vunpack.c.l.b16 %v440
      %v585 = vunpack.c.l.b16 %v441
      %v586 = vunpack.c.l.b16 %v442
      %v587 = vunpack.c.l.b16 %v443
      %v588 = vunpack.c.l.b16 %v444
      %v589 = vunpack.c.l.b16 %v445
      %v590 = vunpack.c.l.b16 %v446
      %v591 = vunpack.c.l.b16 %v447
      %v592 = vunpack.c.l.b16 %v448
      %v593 = vunpack.c.l.b16 %v449
      %v594 = vunpack.c.l.b16 %v450
      %v595 = vunpack.c.l.b16 %v451
      %v596 = vunpack.c.l.b16 %v452
      %v597 = vunpack.c.l.b16 %v453
      %v598 = vunpack.c.l.b16 %v454
      %v599 = vunpack.c.l.b16 %v455
      %v600 = vunpack.c.l.b16 %v456
      %v601 = vunpack.c.l.b16 %v457
      %v602 = vunpack.c.l.b16 %v458
      %v603 = vunpack.c.l.b16 %v459
      %v604 = vunpack.c.l.b16 %v460
      %v605 = vunpack.c.l.b16 %v461
      %v606 = vunpack.c.l.b16 %v462
      %v607 = vunpack.c.l.b16 %v463
      %v608 = vunpack.c.l.b16 %v464
      %v609 = vunpack.c.l.b16 %v465
      %v610 = vunpack.c.l.b16 %v466
      %v611 = vunpack.c.l.b16 %v467
      %v612 = vunpack.c.l.b16 %v468
      %v613 = vunpack.c.l.b16 %v469
      %v614 = vunpack.c.l.b16 %v470
      %v615 = vunpack.c.l.b16 %v471
      %v616 = vunpack.c.l.b16 %v472
      %v617 = vunpack.c.l.b16 %v473
      %v618 = vunpack.c.l.b16 %v474
      %v619 = vunpack.c.l.b16 %v475
      %v620 = vunpack.c.l.b16 %v476
      %v621 = vunpack.c.l.b16 %v477
      %v622 = vunpack.c.l.b16 %v478
      %v623 = vunpack.c.l.b16 %v479
      %v624 = vunpack.c.l.b16 %v480
      %v625 = vunpack.c.l.b16 %v481
      %v626 = vunpack.c.l.b16 %v482
      %v627 = vunpack.c.l.b16 %v483
      %v628 = vunpack.c.l.b16 %v484
      %v629 = vunpack.c.l.b16 %v485
      %v630 = vunpack.c.l.b16 %v486
      %v631 = vunpack.c.l.b16 %v487
      %v632 = vunpack.c.l.b16 %v488
      %v633 = vunpack.c.l.b16 %v489
      %v634 = vunpack.c.l.b16 %v490
      %v635 = vunpack.c.l.b16 %v491
      %v636 = vunpack.c.l.b16 %v492
      %v637 = vunpack.c.l.b16 %v493
      %v638 = vunpack.c.l.b16 %v494
      %v639 = vunpack.c.l.b16 %v495
      %v640 = vunpack.c.l.b16 %v496
      %v641 = vpack.c.b16 %v578, %v577
      %v642 = vpack.c.b16 %v580, %v579
      %v643 = vpack.c.b16 %v582, %v581
      %v644 = vpack.c.b16 %v584, %v583
      %v645 = vpack.c.b16 %v586, %v585
      %v646 = vpack.c.b16 %v588, %v587
      %v647 = vpack.c.b16 %v590, %v589
      %v648 = vpack.c.b16 %v592, %v591
      %v649 = vpack.c.b16 %v594, %v593
      %v650 = vpack.c.b16 %v596, %v595
      %v651 = vpack.c.b16 %v598, %v597
      %v652 = vpack.c.b16 %v600, %v599
      %v653 = vpack.c.b16 %v602, %v601
      %v654 = vpack.c.b16 %v604, %v603
      %v655 = vpack.c.b16 %v606, %v605
      %v656 = vpack.c.b16 %v608, %v607
      %v657 = vpack.c.b16 %v610, %v609
      %v658 = vpack.c.b16 %v612, %v611
      %v659 = vpack.c.b16 %v614, %v613
      %v660 = vpack.c.b16 %v616, %v615
      %v661 = vpack.c.b16 %v618, %v617
      %v662 = vpack.c.b16 %v620, %v619
      %v663 = vpack.c.b16 %v622, %v621
      %v664 = vpack.c.b16 %v624, %v623
      %v665 = vpack.c.b16 %v626, %v625
      %v666 = vpack.c.b16 %v628, %v627
      %v667 = vpack.c.b16 %v630, %v629
      %v668 = vpack.c.b16 %v632, %v631
      %v669 = vpack.c.b16 %v634, %v633
      %v670 = vpack.c.b16 %v636, %v635
      %v671 = vpack.c.b16 %v638, %v637
      %v672 = vpack.c.b16 %v640, %v639
      %v721 = vunpack.c.l.b16 %v497
      %v722 = vunpack.c.l.b16 %v498
      %v723 = vunpack.c.l.b16 %v499
      %v724 = vunpack.c.l.b16 %v500
      %v725 = vunpack.c.l.b16 %v501
      %v726 = vunpack.c.l.b16 %v502
      %v727 = vunpack.c.l.b16 %v503
      %v728 = vunpack.c.l.b16 %v504
      %v729 = vunpack.c.l.b16 %v505
      %v730 = vunpack.c.l.b16 %v506
      %v731 = vunpack.c.l.b16 %v507
      %v732 = vunpack.c.l.b16 %v508
      %v733 = vunpack.c.l.b16 %v509
      %v734 = vunpack.c.l.b16 %v510
      %v735 = vunpack.c.l.b16 %v511
      %v736 = vunpack.c.l.b16 %v512
      %v737 = vpack.c.b16 %v722, %v721
      %v738 = vpack.c.b16 %v724, %v723
      %v739 = vpack.c.b16 %v726, %v725
      %v740 = vpack.c.b16 %v728, %v727
      %v741 = vpack.c.b16 %v730, %v729
      %v742 = vpack.c.b16 %v732, %v731
      %v743 = vpack.c.b16 %v734, %v733
      %v744 = vpack.c.b16 %v736, %v735
      %753 = vmatprep.subr.bf16.mxu0 0
      %754 = vmatpush1.bf16.msra.mxu0 %v737
      %755 = vmatprep.subr.bf16.mxu0 0
      %756 = vmatpush1.bf16.msra.mxu0 %v738
      %757 = vmatprep.subr.bf16.mxu0 0
      %758 = vmatpush1.bf16.msra.mxu0 %v739
      %759 = vmatprep.subr.bf16.mxu0 0
      %760 = vmatpush1.bf16.msra.mxu0 %v740
      %761 = vmatprep.subr.bf16.mxu0 0
      %762 = vmatpush1.bf16.msra.mxu0 %v741
      %763 = vmatprep.subr.bf16.mxu0 0
      %764 = vmatpush1.bf16.msra.mxu0 %v742
      %765 = vmatprep.subr.bf16.mxu0 0
      %766 = vmatpush1.bf16.msra.mxu0 %v743
      %767 = vmatprep.subr.bf16.mxu0 0
      %768 = vmatpush1.bf16.msra.mxu0 %v744
      %769 = vmatprep.subr.bf16.mxu0 0
      %770 = vmatpush1.bf16.msra.mxu0 0
      %771 = vmatprep.subr.bf16.mxu0 0
      %772 = vmatpush1.bf16.msra.mxu0 0
      %773 = vmatprep.subr.bf16.mxu0 0
      %774 = vmatpush1.bf16.msra.mxu0 0
      %775 = vmatprep.subr.bf16.mxu0 0
      %776 = vmatpush1.bf16.msra.mxu0 0
      %777 = vmatprep.subr.bf16.mxu0 0
      %778 = vmatpush1.bf16.msra.mxu0 0
      %779 = vmatprep.subr.bf16.mxu0 0
      %780 = vmatpush1.bf16.msra.mxu0 0
      %781 = vmatprep.subr.bf16.mxu0 0
      %782 = vmatpush1.bf16.msra.mxu0 0
      %783 = vmatprep.subr.bf16.mxu0 0
      %784 = vmatpush1.bf16.msra.mxu0 0
      %785 = vmatprep.mubr.bf16.mxu0 0
      %786 = vmatmul.mubr.bf16.gmra.mrb[0].mxu0 %v641
      %v787 = vpop.f32.mrb[0].mxu0
      %v788 = vadd.f32 0.0, %v787
      %v789 = vpop.f32.mrb[0].mxu0
      %v790 = vpop.f32.mrb[0].mxu0
      %v791 = vadd.f32 0.0, %v790
      %v792 = vpop.f32.mrb[0].mxu0
      %793 = vmatprep.mubr.bf16.mxu0 0
      %794 = vmatmul.mubr.bf16.gmra.mrb[0].mxu0 %v642
      %v795 = vpop.f32.mrb[0].mxu0
      %v796 = vadd.f32 0.0, %v795
      %v797 = vpop.f32.mrb[0].mxu0
      %v798 = vpop.f32.mrb[0].mxu0
      %v799 = vadd.f32 0.0, %v798
      %v800 = vpop.f32.mrb[0].mxu0
      %801 = vmatprep.mubr.bf16.mxu0 0
      %802 = vmatmul.mubr.bf16.gmra.mrb[0].mxu0 %v643
      %v803 = vpop.f32.mrb[0].mxu0
      %v804 = vadd.f32 0.0, %v803
      %v805 = vpop.f32.mrb[0].mxu0
      %v806 = vpop.f32.mrb[0].mxu0
      %v807 = vadd.f32 0.0, %v806
      %v808 = vpop.f32.mrb[0].mxu0
      %809 = vmatprep.mubr.bf16.mxu0 0
      %810 = vmatmul.mubr.bf16.gmra.mrb[0].mxu0 %v644
      %v811 = vpop.f32.mrb[0].mxu0
      %v812 = vadd.f32 0.0, %v811
      %v813 = vpop.f32.mrb[0].mxu0
      %v814 = vpop.f32.mrb[0].mxu0
      %v815 = vadd.f32 0.0, %v814
      %v816 = vpop.f32.mrb[0].mxu0
      %817 = vmatprep.mubr.bf16.mxu0 0
      %818 = vmatmul.mubr.bf16.gmra.mrb[0].mxu0 %v645
      %v819 = vpop.f32.mrb[0].mxu0
      %v820 = vadd.f32 0.0, %v819
      %v821 = vpop.f32.mrb[0].mxu0
      %v822 = vpop.f32.mrb[0].mxu0
      %v823 = vadd.f32 0.0, %v822
      %v824 = vpop.f32.mrb[0].mxu0
      %825 = vmatprep.mubr.bf16.mxu0 0
      %826 = vmatmul.mubr.bf16.gmra.mrb[0].mxu0 %v646
      %v827 = vpop.f32.mrb[0].mxu0
      %v828 = vadd.f32 0.0, %v827
      %v829 = vpop.f32.mrb[0].mxu0
      %v830 = vpop.f32.mrb[0].mxu0
      %v831 = vadd.f32 0.0, %v830
      %v832 = vpop.f32.mrb[0].mxu0
      %833 = vmatprep.mubr.bf16.mxu0 0
      %834 = vmatmul.mubr.bf16.gmra.mrb[0].mxu0 %v647
      %v835 = vpop.f32.mrb[0].mxu0
      %v836 = vadd.f32 0.0, %v835
      %v837 = vpop.f32.mrb[0].mxu0
      %v838 = vpop.f32.mrb[0].mxu0
      %v839 = vadd.f32 0.0, %v838
      %v840 = vpop.f32.mrb[0].mxu0
      %841 = vmatprep.mubr.bf16.mxu0 0
      %842 = vmatmul.mubr.bf16.gmra.mrb[0].mxu0 %v648
      %v843 = vpop.f32.mrb[0].mxu0
      %v844 = vadd.f32 0.0, %v843
      %v845 = vpop.f32.mrb[0].mxu0
      %v846 = vpop.f32.mrb[0].mxu0
      %v847 = vadd.f32 0.0, %v846
      %v848 = vpop.f32.mrb[0].mxu0
      %849 = vmatprep.mubr.bf16.mxu0 0
      %850 = vmatmul.mubr.bf16.gmra.mrb[0].mxu0 %v649
      %v851 = vpop.f32.mrb[0].mxu0
      %v852 = vadd.f32 0.0, %v851
      %v853 = vpop.f32.mrb[0].mxu0
      %v854 = vpop.f32.mrb[0].mxu0
      %v855 = vadd.f32 0.0, %v854
      %v856 = vpop.f32.mrb[0].mxu0
      %857 = vmatprep.mubr.bf16.mxu0 0
      %858 = vmatmul.mubr.bf16.gmra.mrb[0].mxu0 %v650
      %v859 = vpop.f32.mrb[0].mxu0
      %v860 = vadd.f32 0.0, %v859
      %v861 = vpop.f32.mrb[0].mxu0
      %v862 = vpop.f32.mrb[0].mxu0
      %v863 = vadd.f32 0.0, %v862
      %v864 = vpop.f32.mrb[0].mxu0
      %865 = vmatprep.mubr.bf16.mxu0 0
      %866 = vmatmul.mubr.bf16.gmra.mrb[0].mxu0 %v651
      %v867 = vpop.f32.mrb[0].mxu0
      %v868 = vadd.f32 0.0, %v867
      %v869 = vpop.f32.mrb[0].mxu0
      %v870 = vpop.f32.mrb[0].mxu0
      %v871 = vadd.f32 0.0, %v870
      %v872 = vpop.f32.mrb[0].mxu0
      %873 = vmatprep.mubr.bf16.mxu0 0
      %874 = vmatmul.mubr.bf16.gmra.mrb[0].mxu0 %v652
      %v875 = vpop.f32.mrb[0].mxu0
      %v876 = vadd.f32 0.0, %v875
      %v877 = vpop.f32.mrb[0].mxu0
      %v878 = vpop.f32.mrb[0].mxu0
      %v879 = vadd.f32 0.0, %v878
      %v880 = vpop.f32.mrb[0].mxu0
      %881 = vmatprep.mubr.bf16.mxu0 0
      %882 = vmatmul.mubr.bf16.gmra.mrb[0].mxu0 %v653
      %v883 = vpop.f32.mrb[0].mxu0
      %v884 = vadd.f32 0.0, %v883
      %v885 = vpop.f32.mrb[0].mxu0
      %v886 = vpop.f32.mrb[0].mxu0
      %v887 = vadd.f32 0.0, %v886
      %v888 = vpop.f32.mrb[0].mxu0
      %889 = vmatprep.mubr.bf16.mxu0 0
      %890 = vmatmul.mubr.bf16.gmra.mrb[0].mxu0 %v654
      %v891 = vpop.f32.mrb[0].mxu0
      %v892 = vadd.f32 0.0, %v891
      %v893 = vpop.f32.mrb[0].mxu0
      %v894 = vpop.f32.mrb[0].mxu0
      %v895 = vadd.f32 0.0, %v894
      %v896 = vpop.f32.mrb[0].mxu0
      %897 = vmatprep.mubr.bf16.mxu0 0
      %898 = vmatmul.mubr.bf16.gmra.mrb[0].mxu0 %v655
      %v899 = vpop.f32.mrb[0].mxu0
      %v900 = vadd.f32 0.0, %v899
      %v901 = vpop.f32.mrb[0].mxu0
      %v902 = vpop.f32.mrb[0].mxu0
      %v903 = vadd.f32 0.0, %v902
      %v904 = vpop.f32.mrb[0].mxu0
      %905 = vmatprep.mubr.bf16.mxu0 0
      %906 = vmatmul.mubr.bf16.gmra.mrb[0].mxu0 %v656
      %v907 = vpop.f32.mrb[0].mxu0
      %v908 = vadd.f32 0.0, %v907
      %v909 = vpop.f32.mrb[0].mxu0
      %v910 = vpop.f32.mrb[0].mxu0
      %v911 = vadd.f32 0.0, %v910
      %v912 = vpop.f32.mrb[0].mxu0
      %913 = vmatprep.mubr.bf16.mxu0 0
      %914 = vmatmul.mubr.bf16.gmra.mrb[0].mxu0 %v657
      %v915 = vpop.f32.mrb[0].mxu0
      %v916 = vadd.f32 0.0, %v915
      %v917 = vpop.f32.mrb[0].mxu0
      %v918 = vpop.f32.mrb[0].mxu0
      %v919 = vadd.f32 0.0, %v918
      %v920 = vpop.f32.mrb[0].mxu0
      %921 = vmatprep.mubr.bf16.mxu0 0
      %922 = vmatmul.mubr.bf16.gmra.mrb[0].mxu0 %v658
      %v923 = vpop.f32.mrb[0].mxu0
      %v924 = vadd.f32 0.0, %v923
      %v925 = vpop.f32.mrb[0].mxu0
      %v926 = vpop.f32.mrb[0].mxu0
      %v927 = vadd.f32 0.0, %v926
      %v928 = vpop.f32.mrb[0].mxu0
      %929 = vmatprep.mubr.bf16.mxu0 0
      %930 = vmatmul.mubr.bf16.gmra.mrb[0].mxu0 %v659
      %v931 = vpop.f32.mrb[0].mxu0
      %v932 = vadd.f32 0.0, %v931
      %v933 = vpop.f32.mrb[0].mxu0
      %v934 = vpop.f32.mrb[0].mxu0
      %v935 = vadd.f32 0.0, %v934
      %v936 = vpop.f32.mrb[0].mxu0
      %937 = vmatprep.mubr.bf16.mxu0 0
      %938 = vmatmul.mubr.bf16.gmra.mrb[0].mxu0 %v660
      %v939 = vpop.f32.mrb[0].mxu0
      %v940 = vadd.f32 0.0, %v939
      %v941 = vpop.f32.mrb[0].mxu0
      %v942 = vpop.f32.mrb[0].mxu0
      %v943 = vadd.f32 0.0, %v942
      %v944 = vpop.f32.mrb[0].mxu0
      %945 = vmatprep.mubr.bf16.mxu0 0
      %946 = vmatmul.mubr.bf16.gmra.mrb[0].mxu0 %v661
      %v947 = vpop.f32.mrb[0].mxu0
      %v948 = vadd.f32 0.0, %v947
      %v949 = vpop.f32.mrb[0].mxu0
      %v950 = vpop.f32.mrb[0].mxu0
      %v951 = vadd.f32 0.0, %v950
      %v952 = vpop.f32.mrb[0].mxu0
      %953 = vmatprep.mubr.bf16.mxu0 0
      %954 = vmatmul.mubr.bf16.gmra.mrb[0].mxu0 %v662
      %v955 = vpop.f32.mrb[0].mxu0
      %v956 = vadd.f32 0.0, %v955
      %v957 = vpop.f32.mrb[0].mxu0
      %v958 = vpop.f32.mrb[0].mxu0
      %v959 = vadd.f32 0.0, %v958
      %v960 = vpop.f32.mrb[0].mxu0
      %961 = vmatprep.mubr.bf16.mxu0 0
      %962 = vmatmul.mubr.bf16.gmra.mrb[0].mxu0 %v663
      %v963 = vpop.f32.mrb[0].mxu0
      %v964 = vadd.f32 0.0, %v963
      %v965 = vpop.f32.mrb[0].mxu0
      %v966 = vpop.f32.mrb[0].mxu0
      %v967 = vadd.f32 0.0, %v966
      %v968 = vpop.f32.mrb[0].mxu0
      %969 = vmatprep.mubr.bf16.mxu0 0
      %970 = vmatmul.mubr.bf16.gmra.mrb[0].mxu0 %v664
      %v971 = vpop.f32.mrb[0].mxu0
      %v972 = vadd.f32 0.0, %v971
      %v973 = vpop.f32.mrb[0].mxu0
      %v974 = vpop.f32.mrb[0].mxu0
      %v975 = vadd.f32 0.0, %v974
      %v976 = vpop.f32.mrb[0].mxu0
      %977 = vmatprep.mubr.bf16.mxu0 0
      %978 = vmatmul.mubr.bf16.gmra.mrb[0].mxu0 %v665
      %v979 = vpop.f32.mrb[0].mxu0
      %v980 = vadd.f32 0.0, %v979
      %v981 = vpop.f32.mrb[0].mxu0
      %v982 = vpop.f32.mrb[0].mxu0
      %v983 = vadd.f32 0.0, %v982
      %v984 = vpop.f32.mrb[0].mxu0
      %985 = vmatprep.mubr.bf16.mxu0 0
      %986 = vmatmul.mubr.bf16.gmra.mrb[0].mxu0 %v666
      %v987 = vpop.f32.mrb[0].mxu0
      %v988 = vadd.f32 0.0, %v987
      %v989 = vpop.f32.mrb[0].mxu0
      %v990 = vpop.f32.mrb[0].mxu0
      %v991 = vadd.f32 0.0, %v990
      %v992 = vpop.f32.mrb[0].mxu0
      %993 = vmatprep.mubr.bf16.mxu0 0
      %994 = vmatmul.mubr.bf16.gmra.mrb[0].mxu0 %v667
      %v995 = vpop.f32.mrb[0].mxu0
      %v996 = vadd.f32 0.0, %v995
      %v997 = vpop.f32.mrb[0].mxu0
      %v998 = vpop.f32.mrb[0].mxu0
      %v999 = vadd.f32 0.0, %v998
      %v1000 = vpop.f32.mrb[0].mxu0
      %1001 = vmatprep.mubr.bf16.mxu0 0
      %1002 = vmatmul.mubr.bf16.gmra.mrb[0].mxu0 %v668
      %v1003 = vpop.f32.mrb[0].mxu0
      %v1004 = vadd.f32 0.0, %v1003
      %v1005 = vpop.f32.mrb[0].mxu0
      %v1006 = vpop.f32.mrb[0].mxu0
      %v1007 = vadd.f32 0.0, %v1006
      %v1008 = vpop.f32.mrb[0].mxu0
      %1009 = vmatprep.mubr.bf16.mxu0 0
      %1010 = vmatmul.mubr.bf16.gmra.mrb[0].mxu0 %v669
      %v1011 = vpop.f32.mrb[0].mxu0
      %v1012 = vadd.f32 0.0, %v1011
      %v1013 = vpop.f32.mrb[0].mxu0
      %v1014 = vpop.f32.mrb[0].mxu0
      %v1015 = vadd.f32 0.0, %v1014
      %v1016 = vpop.f32.mrb[0].mxu0
      %1017 = vmatprep.mubr.bf16.mxu0 0
      %1018 = vmatmul.mubr.bf16.gmra.mrb[0].mxu0 %v670
      %v1019 = vpop.f32.mrb[0].mxu0
      %v1020 = vadd.f32 0.0, %v1019
      %v1021 = vpop.f32.mrb[0].mxu0
      %v1022 = vpop.f32.mrb[0].mxu0
      %v1023 = vadd.f32 0.0, %v1022
      %v1024 = vpop.f32.mrb[0].mxu0
      %1025 = vmatprep.mubr.bf16.mxu0 0
      %1026 = vmatmul.mubr.bf16.gmra.mrb[0].mxu0 %v671
      %v1027 = vpop.f32.mrb[0].mxu0
      %v1028 = vadd.f32 0.0, %v1027
      %v1029 = vpop.f32.mrb[0].mxu0
      %v1030 = vpop.f32.mrb[0].mxu0
      %v1031 = vadd.f32 0.0, %v1030
      %v1032 = vpop.f32.mrb[0].mxu0
      %1033 = vmatprep.mubr.bf16.mxu0 0
      %1034 = vmatmul.mubr.bf16.gmra.mrb[0].mxu0 %v672
      %v1035 = vpop.f32.mrb[0].mxu0
      %v1036 = vadd.f32 0.0, %v1035
      %v1037 = vpop.f32.mrb[0].mxu0
      %v1038 = vpop.f32.mrb[0].mxu0
      %v1039 = vadd.f32 0.0, %v1038
      %v1040 = vpop.f32.mrb[0].mxu0
      %1041 = vdwg.mxu0
      %v1042 = vadd.f32 %v369, %v788
      %v1043 = vadd.f32 %v370, %v791
      %v1044 = vadd.f32 %v371, %v796
      %v1045 = vadd.f32 %v372, %v799
      %v1046 = vadd.f32 %v373, %v804
      %v1047 = vadd.f32 %v374, %v807
      %v1048 = vadd.f32 %v375, %v812
      %v1049 = vadd.f32 %v376, %v815
      %v1050 = vadd.f32 %v377, %v820
      %v1051 = vadd.f32 %v378, %v823
      %v1052 = vadd.f32 %v379, %v828
      %v1053 = vadd.f32 %v380, %v831
      %v1054 = vadd.f32 %v381, %v836
      %v1055 = vadd.f32 %v382, %v839
      %v1056 = vadd.f32 %v383, %v844
      %v1057 = vadd.f32 %v384, %v847
      %v1058 = vadd.f32 %v385, %v852
      %v1059 = vadd.f32 %v386, %v855
      %v1060 = vadd.f32 %v387, %v860
      %v1061 = vadd.f32 %v388, %v863
      %v1062 = vadd.f32 %v389, %v868
      %v1063 = vadd.f32 %v390, %v871
      %v1064 = vadd.f32 %v391, %v876
      %v1065 = vadd.f32 %v392, %v879
      %v1066 = vadd.f32 %v393, %v884
      %v1067 = vadd.f32 %v394, %v887
      %v1068 = vadd.f32 %v395, %v892
      %v1069 = vadd.f32 %v396, %v895
      %v1070 = vadd.f32 %v397, %v900
      %v1071 = vadd.f32 %v398, %v903
      %v1072 = vadd.f32 %v399, %v908
      %v1073 = vadd.f32 %v400, %v911
      %v1074 = vadd.f32 %v401, %v916
      %v1075 = vadd.f32 %v402, %v919
      %v1076 = vadd.f32 %v403, %v924
      %v1077 = vadd.f32 %v404, %v927
      %v1078 = vadd.f32 %v405, %v932
      %v1079 = vadd.f32 %v406, %v935
      %v1080 = vadd.f32 %v407, %v940
      %v1081 = vadd.f32 %v408, %v943
      %v1082 = vadd.f32 %v409, %v948
      %v1083 = vadd.f32 %v410, %v951
      %v1084 = vadd.f32 %v411, %v956
      %v1085 = vadd.f32 %v412, %v959
      %v1086 = vadd.f32 %v413, %v964
      %v1087 = vadd.f32 %v414, %v967
      %v1088 = vadd.f32 %v415, %v972
      %v1089 = vadd.f32 %v416, %v975
      %v1090 = vadd.f32 %v417, %v980
      %v1091 = vadd.f32 %v418, %v983
      %v1092 = vadd.f32 %v419, %v988
      %v1093 = vadd.f32 %v420, %v991
      %v1094 = vadd.f32 %v421, %v996
      %v1095 = vadd.f32 %v422, %v999
      %v1096 = vadd.f32 %v423, %v1004
      %v1097 = vadd.f32 %v424, %v1007
      %v1098 = vadd.f32 %v425, %v1012
      %v1099 = vadd.f32 %v426, %v1015
      %v1100 = vadd.f32 %v427, %v1020
      %v1101 = vadd.f32 %v428, %v1023
      %v1102 = vadd.f32 %v429, %v1028
      %v1103 = vadd.f32 %v430, %v1031
      %v1104 = vadd.f32 %v431, %v1036
      %v1105 = vadd.f32 %v432, %v1039
      %1106 = vst [vmem:[#allocation2] sm:$0xff] %v1042
      %1107 = vst [vmem:[#allocation2 + $0x8] sm:$0xff] %v1043
      %1108 = vst [vmem:[#allocation2 + $0x10] sm:$0xff] %v1044
      %1109 = vst [vmem:[#allocation2 + $0x18] sm:$0xff] %v1045
      %1110 = vst [vmem:[#allocation2 + $0x20] sm:$0xff] %v1046
      %1111 = vst [vmem:[#allocation2 + $0x28] sm:$0xff] %v1047
      %1112 = vst [vmem:[#allocation2 + $0x30] sm:$0xff] %v1048
      %1113 = vst [vmem:[#allocation2 + $0x38] sm:$0xff] %v1049
      %1114 = vst [vmem:[#allocation2 + $0x40] sm:$0xff] %v1050
      %1115 = vst [vmem:[#allocation2 + $0x48] sm:$0xff] %v1051
      %1116 = vst [vmem:[#allocation2 + $0x50] sm:$0xff] %v1052
      %1117 = vst [vmem:[#allocation2 + $0x58] sm:$0xff] %v1053
      %1118 = vst [vmem:[#allocation2 + $0x60] sm:$0xff] %v1054
      %1119 = vst [vmem:[#allocation2 + $0x68] sm:$0xff] %v1055
      %1120 = vst [vmem:[#allocation2 + $0x70] sm:$0xff] %v1056
      %1121 = vst [vmem:[#allocation2 + $0x78] sm:$0xff] %v1057
      %1122 = vst [vmem:[#allocation2 + $0x80] sm:$0xff] %v1058
      %1123 = vst [vmem:[#allocation2 + $0x88] sm:$0xff] %v1059
      %1124 = vst [vmem:[#allocation2 + $0x90] sm:$0xff] %v1060
      %1125 = vst [vmem:[#allocation2 + $0x98] sm:$0xff] %v1061
      %1126 = vst [vmem:[#allocation2 + $0xa0] sm:$0xff] %v1062
      %1127 = vst [vmem:[#allocation2 + $0xa8] sm:$0xff] %v1063
      %1128 = vst [vmem:[#allocation2 + $0xb0] sm:$0xff] %v1064
      %1129 = vst [vmem:[#allocation2 + $0xb8] sm:$0xff] %v1065
      %1130 = vst [vmem:[#allocation2 + $0xc0] sm:$0xff] %v1066
      %1131 = vst [vmem:[#allocation2 + $0xc8] sm:$0xff] %v1067
      %1132 = vst [vmem:[#allocation2 + $0xd0] sm:$0xff] %v1068
      %1133 = vst [vmem:[#allocation2 + $0xd8] sm:$0xff] %v1069
      %1134 = vst [vmem:[#allocation2 + $0xe0] sm:$0xff] %v1070
      %1135 = vst [vmem:[#allocation2 + $0xe8] sm:$0xff] %v1071
      %1136 = vst [vmem:[#allocation2 + $0xf0] sm:$0xff] %v1072
      %1137 = vst [vmem:[#allocation2 + $0xf8] sm:$0xff] %v1073
      %1138 = vst [vmem:[#allocation2 + $0x100] sm:$0xff] %v1074
      %1139 = vst [vmem:[#allocation2 + $0x108] sm:$0xff] %v1075
      %1140 = vst [vmem:[#allocation2 + $0x110] sm:$0xff] %v1076
      %1141 = vst [vmem:[#allocation2 + $0x118] sm:$0xff] %v1077
      %1142 = vst [vmem:[#allocation2 + $0x120] sm:$0xff] %v1078
      %1143 = vst [vmem:[#allocation2 + $0x128] sm:$0xff] %v1079
      %1144 = vst [vmem:[#allocation2 + $0x130] sm:$0xff] %v1080
      %1145 = vst [vmem:[#allocation2 + $0x138] sm:$0xff] %v1081
      %1146 = vst [vmem:[#allocation2 + $0x140] sm:$0xff] %v1082
      %1147 = vst [vmem:[#allocation2 + $0x148] sm:$0xff] %v1083
      %1148 = vst [vmem:[#allocation2 + $0x150] sm:$0xff] %v1084
      %1149 = vst [vmem:[#allocation2 + $0x158] sm:$0xff] %v1085
      %1150 = vst [vmem:[#allocation2 + $0x160] sm:$0xff] %v1086
      %1151 = vst [vmem:[#allocation2 + $0x168] sm:$0xff] %v1087
      %1152 = vst [vmem:[#allocation2 + $0x170] sm:$0xff] %v1088
      %1153 = vst [vmem:[#allocation2 + $0x178] sm:$0xff] %v1089
      %1154 = vst [vmem:[#allocation2 + $0x180] sm:$0xff] %v1090
      %1155 = vst [vmem:[#allocation2 + $0x188] sm:$0xff] %v1091
      %1156 = vst [vmem:[#allocation2 + $0x190] sm:$0xff] %v1092
      %1157 = vst [vmem:[#allocation2 + $0x198] sm:$0xff] %v1093
      %1158 = vst [vmem:[#allocation2 + $0x1a0] sm:$0xff] %v1094
      %1159 = vst [vmem:[#allocation2 + $0x1a8] sm:$0xff] %v1095
      %1160 = vst [vmem:[#allocation2 + $0x1b0] sm:$0xff] %v1096
      %1161 = vst [vmem:[#allocation2 + $0x1b8] sm:$0xff] %v1097
      %1162 = vst [vmem:[#allocation2 + $0x1c0] sm:$0xff] %v1098
      %1163 = vst [vmem:[#allocation2 + $0x1c8] sm:$0xff] %v1099
      %1164 = vst [vmem:[#allocation2 + $0x1d0] sm:$0xff] %v1100
      %1165 = vst [vmem:[#allocation2 + $0x1d8] sm:$0xff] %v1101
      %1166 = vst [vmem:[#allocation2 + $0x1e0] sm:$0xff] %v1102
      %1167 = vst [vmem:[#allocation2 + $0x1e8] sm:$0xff] %v1103
      %1168 = vst [vmem:[#allocation2 + $0x1f0] sm:$0xff] %v1104
      %1169 = vst [vmem:[#allocation2 + $0x1f8] sm:$0xff] %v1105
      // Predicated region
      $region41: #{_matmul_affine_act.1} parent=35 // pred_check
        %p1170 = pneg %p301
      $region42: #{_matmul_affine_act.1} parent=35 // pred_check_branch
        %1172 = sbr.rel (%p1170) target = $region44
      $region43: #{_matmul_affine_act.1} parent=35 // pred_region
        %v1173 = vld [vmem:[#allocation2] sm:$0xff]
        %v1174 = vld [vmem:[#allocation2 + $0x8] sm:$0xff]
        %v1175 = vld [vmem:[#allocation2 + $0x10] sm:$0xff]
        %v1176 = vld [vmem:[#allocation2 + $0x18] sm:$0xff]
        %v1177 = vld [vmem:[#allocation2 + $0x20] sm:$0xff]
        %v1178 = vld [vmem:[#allocation2 + $0x28] sm:$0xff]
        %v1179 = vld [vmem:[#allocation2 + $0x30] sm:$0xff]
        %v1180 = vld [vmem:[#allocation2 + $0x38] sm:$0xff]
        %v1181 = vld [vmem:[#allocation2 + $0x40] sm:$0xff]
        %v1182 = vld [vmem:[#allocation2 + $0x48] sm:$0xff]
        %v1183 = vld [vmem:[#allocation2 + $0x50] sm:$0xff]
        %v1184 = vld [vmem:[#allocation2 + $0x58] sm:$0xff]
        %v1185 = vld [vmem:[#allocation2 + $0x60] sm:$0xff]
        %v1186 = vld [vmem:[#allocation2 + $0x68] sm:$0xff]
        %v1187 = vld [vmem:[#allocation2 + $0x70] sm:$0xff]
        %v1188 = vld [vmem:[#allocation2 + $0x78] sm:$0xff]
        %v1189 = vld [vmem:[#allocation2 + $0x80] sm:$0xff]
        %v1190 = vld [vmem:[#allocation2 + $0x88] sm:$0xff]
        %v1191 = vld [vmem:[#allocation2 + $0x90] sm:$0xff]
        %v1192 = vld [vmem:[#allocation2 + $0x98] sm:$0xff]
        %v1193 = vld [vmem:[#allocation2 + $0xa0] sm:$0xff]
        %v1194 = vld [vmem:[#allocation2 + $0xa8] sm:$0xff]
        %v1195 = vld [vmem:[#allocation2 + $0xb0] sm:$0xff]
        %v1196 = vld [vmem:[#allocation2 + $0xb8] sm:$0xff]
        %v1197 = vld [vmem:[#allocation2 + $0xc0] sm:$0xff]
        %v1198 = vld [vmem:[#allocation2 + $0xc8] sm:$0xff]
        %v1199 = vld [vmem:[#allocation2 + $0xd0] sm:$0xff]
        %v1200 = vld [vmem:[#allocation2 + $0xd8] sm:$0xff]
        %v1201 = vld [vmem:[#allocation2 + $0xe0] sm:$0xff]
        %v1202 = vld [vmem:[#allocation2 + $0xe8] sm:$0xff]
        %v1203 = vld [vmem:[#allocation2 + $0xf0] sm:$0xff]
        %v1204 = vld [vmem:[#allocation2 + $0xf8] sm:$0xff]
        %v1205 = vld [vmem:[#allocation2 + $0x100] sm:$0xff]
        %v1206 = vld [vmem:[#allocation2 + $0x108] sm:$0xff]
        %v1207 = vld [vmem:[#allocation2 + $0x110] sm:$0xff]
        %v1208 = vld [vmem:[#allocation2 + $0x118] sm:$0xff]
        %v1209 = vld [vmem:[#allocation2 + $0x120] sm:$0xff]
        %v1210 = vld [vmem:[#allocation2 + $0x128] sm:$0xff]
        %v1211 = vld [vmem:[#allocation2 + $0x130] sm:$0xff]
        %v1212 = vld [vmem:[#allocation2 + $0x138] sm:$0xff]
        %v1213 = vld [vmem:[#allocation2 + $0x140] sm:$0xff]
        %v1214 = vld [vmem:[#allocation2 + $0x148] sm:$0xff]
        %v1215 = vld [vmem:[#allocation2 + $0x150] sm:$0xff]
        %v1216 = vld [vmem:[#allocation2 + $0x158] sm:$0xff]
        %v1217 = vld [vmem:[#allocation2 + $0x160] sm:$0xff]
        %v1218 = vld [vmem:[#allocation2 + $0x168] sm:$0xff]
        %v1219 = vld [vmem:[#allocation2 + $0x170] sm:$0xff]
        %v1220 = vld [vmem:[#allocation2 + $0x178] sm:$0xff]
        %v1221 = vld [vmem:[#allocation2 + $0x180] sm:$0xff]
        %v1222 = vld [vmem:[#allocation2 + $0x188] sm:$0xff]
        %v1223 = vld [vmem:[#allocation2 + $0x190] sm:$0xff]
        %v1224 = vld [vmem:[#allocation2 + $0x198] sm:$0xff]
        %v1225 = vld [vmem:[#allocation2 + $0x1a0] sm:$0xff]
        %v1226 = vld [vmem:[#allocation2 + $0x1a8] sm:$0xff]
        %v1227 = vld [vmem:[#allocation2 + $0x1b0] sm:$0xff]
        %v1228 = vld [vmem:[#allocation2 + $0x1b8] sm:$0xff]
        %v1229 = vld [vmem:[#allocation2 + $0x1c0] sm:$0xff]
        %v1230 = vld [vmem:[#allocation2 + $0x1c8] sm:$0xff]
        %v1231 = vld [vmem:[#allocation2 + $0x1d0] sm:$0xff]
        %v1232 = vld [vmem:[#allocation2 + $0x1d8] sm:$0xff]
        %v1233 = vld [vmem:[#allocation2 + $0x1e0] sm:$0xff]
        %v1234 = vld [vmem:[#allocation2 + $0x1e8] sm:$0xff]
        %v1235 = vld [vmem:[#allocation2 + $0x1f0] sm:$0xff]
        %v1236 = vld [vmem:[#allocation2 + $0x1f8] sm:$0xff]
        %v1237 = vld [vmem:[%s287] sm:$0x1]
        %v1239 = vlaneseq
        %v1240 = vshrl.u32 %v1239, 7
        %v1241 = vsub.s32 0, %v1240
        %v1242 = vrot.slane %v1237, %v1241
        %v1244 = vmul.f32 %v1173, %v1242
        %v1245 = vmul.f32 %v1174, %v1242
        %v1246 = vmul.f32 %v1175, %v1242
        %v1247 = vmul.f32 %v1176, %v1242
        %v1248 = vmul.f32 %v1177, %v1242
        %v1249 = vmul.f32 %v1178, %v1242
        %v1250 = vmul.f32 %v1179, %v1242
        %v1251 = vmul.f32 %v1180, %v1242
        %v1252 = vmul.f32 %v1181, %v1242
        %v1253 = vmul.f32 %v1182, %v1242
        %v1254 = vmul.f32 %v1183, %v1242
        %v1255 = vmul.f32 %v1184, %v1242
        %v1256 = vmul.f32 %v1185, %v1242
        %v1257 = vmul.f32 %v1186, %v1242
        %v1258 = vmul.f32 %v1187, %v1242
        %v1259 = vmul.f32 %v1188, %v1242
        %v1260 = vmul.f32 %v1189, %v1242
        %v1261 = vmul.f32 %v1190, %v1242
        %v1262 = vmul.f32 %v1191, %v1242
        %v1263 = vmul.f32 %v1192, %v1242
        %v1264 = vmul.f32 %v1193, %v1242
        %v1265 = vmul.f32 %v1194, %v1242
        %v1266 = vmul.f32 %v1195, %v1242
        %v1267 = vmul.f32 %v1196, %v1242
        %v1268 = vmul.f32 %v1197, %v1242
        %v1269 = vmul.f32 %v1198, %v1242
        %v1270 = vmul.f32 %v1199, %v1242
        %v1271 = vmul.f32 %v1200, %v1242
        %v1272 = vmul.f32 %v1201, %v1242
        %v1273 = vmul.f32 %v1202, %v1242
        %v1274 = vmul.f32 %v1203, %v1242
        %v1275 = vmul.f32 %v1204, %v1242
        %v1276 = vmul.f32 %v1205, %v1242
        %v1277 = vmul.f32 %v1206, %v1242
        %v1278 = vmul.f32 %v1207, %v1242
        %v1279 = vmul.f32 %v1208, %v1242
        %v1280 = vmul.f32 %v1209, %v1242
        %v1281 = vmul.f32 %v1210, %v1242
        %v1282 = vmul.f32 %v1211, %v1242
        %v1283 = vmul.f32 %v1212, %v1242
        %v1284 = vmul.f32 %v1213, %v1242
        %v1285 = vmul.f32 %v1214, %v1242
        %v1286 = vmul.f32 %v1215, %v1242
        %v1287 = vmul.f32 %v1216, %v1242
        %v1288 = vmul.f32 %v1217, %v1242
        %v1289 = vmul.f32 %v1218, %v1242
        %v1290 = vmul.f32 %v1219, %v1242
        %v1291 = vmul.f32 %v1220, %v1242
        %v1292 = vmul.f32 %v1221, %v1242
        %v1293 = vmul.f32 %v1222, %v1242
        %v1294 = vmul.f32 %v1223, %v1242
        %v1295 = vmul.f32 %v1224, %v1242
        %v1296 = vmul.f32 %v1225, %v1242
        %v1297 = vmul.f32 %v1226, %v1242
        %v1298 = vmul.f32 %v1227, %v1242
        %v1299 = vmul.f32 %v1228, %v1242
        %v1300 = vmul.f32 %v1229, %v1242
        %v1301 = vmul.f32 %v1230, %v1242
        %v1302 = vmul.f32 %v1231, %v1242
        %v1303 = vmul.f32 %v1232, %v1242
        %v1304 = vmul.f32 %v1233, %v1242
        %v1305 = vmul.f32 %v1234, %v1242
        %v1306 = vmul.f32 %v1235, %v1242
        %v1307 = vmul.f32 %v1236, %v1242
        %v1308 = vld [vmem:[%s290] sm:$0x1]
        %v1310 = vlaneseq
        %v1311 = vshrl.u32 %v1310, 7
        %v1312 = vsub.s32 0, %v1311
        %v1313 = vrot.slane %v1308, %v1312
        %v1315 = vadd.f32 %v1244, %v1313
        %v1316 = vadd.f32 %v1245, %v1313
        %v1317 = vadd.f32 %v1246, %v1313
        %v1318 = vadd.f32 %v1247, %v1313
        %v1319 = vadd.f32 %v1248, %v1313
        %v1320 = vadd.f32 %v1249, %v1313
        %v1321 = vadd.f32 %v1250, %v1313
        %v1322 = vadd.f32 %v1251, %v1313
        %v1323 = vadd.f32 %v1252, %v1313
        %v1324 = vadd.f32 %v1253, %v1313
        %v1325 = vadd.f32 %v1254, %v1313
        %v1326 = vadd.f32 %v1255, %v1313
        %v1327 = vadd.f32 %v1256, %v1313
        %v1328 = vadd.f32 %v1257, %v1313
        %v1329 = vadd.f32 %v1258, %v1313
        %v1330 = vadd.f32 %v1259, %v1313
        %v1331 = vadd.f32 %v1260, %v1313
        %v1332 = vadd.f32 %v1261, %v1313
        %v1333 = vadd.f32 %v1262, %v1313
        %v1334 = vadd.f32 %v1263, %v1313
        %v1335 = vadd.f32 %v1264, %v1313
        %v1336 = vadd.f32 %v1265, %v1313
        %v1337 = vadd.f32 %v1266, %v1313
        %v1338 = vadd.f32 %v1267, %v1313
        %v1339 = vadd.f32 %v1268, %v1313
        %v1340 = vadd.f32 %v1269, %v1313
        %v1341 = vadd.f32 %v1270, %v1313
        %v1342 = vadd.f32 %v1271, %v1313
        %v1343 = vadd.f32 %v1272, %v1313
        %v1344 = vadd.f32 %v1273, %v1313
        %v1345 = vadd.f32 %v1274, %v1313
        %v1346 = vadd.f32 %v1275, %v1313
        %v1347 = vadd.f32 %v1276, %v1313
        %v1348 = vadd.f32 %v1277, %v1313
        %v1349 = vadd.f32 %v1278, %v1313
        %v1350 = vadd.f32 %v1279, %v1313
        %v1351 = vadd.f32 %v1280, %v1313
        %v1352 = vadd.f32 %v1281, %v1313
        %v1353 = vadd.f32 %v1282, %v1313
        %v1354 = vadd.f32 %v1283, %v1313
        %v1355 = vadd.f32 %v1284, %v1313
        %v1356 = vadd.f32 %v1285, %v1313
        %v1357 = vadd.f32 %v1286, %v1313
        %v1358 = vadd.f32 %v1287, %v1313
        %v1359 = vadd.f32 %v1288, %v1313
        %v1360 = vadd.f32 %v1289, %v1313
        %v1361 = vadd.f32 %v1290, %v1313
        %v1362 = vadd.f32 %v1291, %v1313
        %v1363 = vadd.f32 %v1292, %v1313
        %v1364 = vadd.f32 %v1293, %v1313
        %v1365 = vadd.f32 %v1294, %v1313
        %v1366 = vadd.f32 %v1295, %v1313
        %v1367 = vadd.f32 %v1296, %v1313
        %v1368 = vadd.f32 %v1297, %v1313
        %v1369 = vadd.f32 %v1298, %v1313
        %v1370 = vadd.f32 %v1299, %v1313
        %v1371 = vadd.f32 %v1300, %v1313
        %v1372 = vadd.f32 %v1301, %v1313
        %v1373 = vadd.f32 %v1302, %v1313
        %v1374 = vadd.f32 %v1303, %v1313
        %v1375 = vadd.f32 %v1304, %v1313
        %v1376 = vadd.f32 %v1305, %v1313
        %v1377 = vadd.f32 %v1306, %v1313
        %v1378 = vadd.f32 %v1307, %v1313
        %vm1379 = vcmp.gt.f32.partialorder %v1315, 0.0
        %vm1380 = vcmp.gt.f32.partialorder %v1316, 0.0
        %vm1381 = vcmp.gt.f32.partialorder %v1317, 0.0
        %vm1382 = vcmp.gt.f32.partialorder %v1318, 0.0
        %vm1383 = vcmp.gt.f32.partialorder %v1319, 0.0
        %vm1384 = vcmp.gt.f32.partialorder %v1320, 0.0
        %vm1385 = vcmp.gt.f32.partialorder %v1321, 0.0
        %vm1386 = vcmp.gt.f32.partialorder %v1322, 0.0
        %vm1387 = vcmp.gt.f32.partialorder %v1323, 0.0
        %vm1388 = vcmp.gt.f32.partialorder %v1324, 0.0
        %vm1389 = vcmp.gt.f32.partialorder %v1325, 0.0
        %vm1390 = vcmp.gt.f32.partialorder %v1326, 0.0
        %vm1391 = vcmp.gt.f32.partialorder %v1327, 0.0
        %vm1392 = vcmp.gt.f32.partialorder %v1328, 0.0
        %vm1393 = vcmp.gt.f32.partialorder %v1329, 0.0
        %vm1394 = vcmp.gt.f32.partialorder %v1330, 0.0
        %vm1395 = vcmp.gt.f32.partialorder %v1331, 0.0
        %vm1396 = vcmp.gt.f32.partialorder %v1332, 0.0
        %vm1397 = vcmp.gt.f32.partialorder %v1333, 0.0
        %vm1398 = vcmp.gt.f32.partialorder %v1334, 0.0
        %vm1399 = vcmp.gt.f32.partialorder %v1335, 0.0
        %vm1400 = vcmp.gt.f32.partialorder %v1336, 0.0
        %vm1401 = vcmp.gt.f32.partialorder %v1337, 0.0
        %vm1402 = vcmp.gt.f32.partialorder %v1338, 0.0
        %vm1403 = vcmp.gt.f32.partialorder %v1339, 0.0
        %vm1404 = vcmp.gt.f32.partialorder %v1340, 0.0
        %vm1405 = vcmp.gt.f32.partialorder %v1341, 0.0
        %vm1406 = vcmp.gt.f32.partialorder %v1342, 0.0
        %vm1407 = vcmp.gt.f32.partialorder %v1343, 0.0
        %vm1408 = vcmp.gt.f32.partialorder %v1344, 0.0
        %vm1409 = vcmp.gt.f32.partialorder %v1345, 0.0
        %vm1410 = vcmp.gt.f32.partialorder %v1346, 0.0
        %vm1411 = vcmp.gt.f32.partialorder %v1347, 0.0
        %vm1412 = vcmp.gt.f32.partialorder %v1348, 0.0
        %vm1413 = vcmp.gt.f32.partialorder %v1349, 0.0
        %vm1414 = vcmp.gt.f32.partialorder %v1350, 0.0
        %vm1415 = vcmp.gt.f32.partialorder %v1351, 0.0
        %vm1416 = vcmp.gt.f32.partialorder %v1352, 0.0
        %vm1417 = vcmp.gt.f32.partialorder %v1353, 0.0
        %vm1418 = vcmp.gt.f32.partialorder %v1354, 0.0
        %vm1419 = vcmp.gt.f32.partialorder %v1355, 0.0
        %vm1420 = vcmp.gt.f32.partialorder %v1356, 0.0
        %vm1421 = vcmp.gt.f32.partialorder %v1357, 0.0
        %vm1422 = vcmp.gt.f32.partialorder %v1358, 0.0
        %vm1423 = vcmp.gt.f32.partialorder %v1359, 0.0
        %vm1424 = vcmp.gt.f32.partialorder %v1360, 0.0
        %vm1425 = vcmp.gt.f32.partialorder %v1361, 0.0
        %vm1426 = vcmp.gt.f32.partialorder %v1362, 0.0
        %vm1427 = vcmp.gt.f32.partialorder %v1363, 0.0
        %vm1428 = vcmp.gt.f32.partialorder %v1364, 0.0
        %vm1429 = vcmp.gt.f32.partialorder %v1365, 0.0
        %vm1430 = vcmp.gt.f32.partialorder %v1366, 0.0
        %vm1431 = vcmp.gt.f32.partialorder %v1367, 0.0
        %vm1432 = vcmp.gt.f32.partialorder %v1368, 0.0
        %vm1433 = vcmp.gt.f32.partialorder %v1369, 0.0
        %vm1434 = vcmp.gt.f32.partialorder %v1370, 0.0
        %vm1435 = vcmp.gt.f32.partialorder %v1371, 0.0
        %vm1436 = vcmp.gt.f32.partialorder %v1372, 0.0
        %vm1437 = vcmp.gt.f32.partialorder %v1373, 0.0
        %vm1438 = vcmp.gt.f32.partialorder %v1374, 0.0
        %vm1439 = vcmp.gt.f32.partialorder %v1375, 0.0
        %vm1440 = vcmp.gt.f32.partialorder %v1376, 0.0
        %vm1441 = vcmp.gt.f32.partialorder %v1377, 0.0
        %vm1442 = vcmp.gt.f32.partialorder %v1378, 0.0
        %v1443 = vmul.f32 %v1315, 0.1
        %v1444 = vmul.f32 %v1316, 0.1
        %v1445 = vmul.f32 %v1317, 0.1
        %v1446 = vmul.f32 %v1318, 0.1
        %v1447 = vmul.f32 %v1319, 0.1
        %v1448 = vmul.f32 %v1320, 0.1
        %v1449 = vmul.f32 %v1321, 0.1
        %v1450 = vmul.f32 %v1322, 0.1
        %v1451 = vmul.f32 %v1323, 0.1
        %v1452 = vmul.f32 %v1324, 0.1
        %v1453 = vmul.f32 %v1325, 0.1
        %v1454 = vmul.f32 %v1326, 0.1
        %v1455 = vmul.f32 %v1327, 0.1
        %v1456 = vmul.f32 %v1328, 0.1
        %v1457 = vmul.f32 %v1329, 0.1
        %v1458 = vmul.f32 %v1330, 0.1
        %v1459 = vmul.f32 %v1331, 0.1
        %v1460 = vmul.f32 %v1332, 0.1
        %v1461 = vmul.f32 %v1333, 0.1
        %v1462 = vmul.f32 %v1334, 0.1
        %v1463 = vmul.f32 %v1335, 0.1
        %v1464 = vmul.f32 %v1336, 0.1
        %v1465 = vmul.f32 %v1337, 0.1
        %v1466 = vmul.f32 %v1338, 0.1
        %v1467 = vmul.f32 %v1339, 0.1
        %v1468 = vmul.f32 %v1340, 0.1
        %v1469 = vmul.f32 %v1341, 0.1
        %v1470 = vmul.f32 %v1342, 0.1
        %v1471 = vmul.f32 %v1343, 0.1
        %v1472 = vmul.f32 %v1344, 0.1
        %v1473 = vmul.f32 %v1345, 0.1
        %v1474 = vmul.f32 %v1346, 0.1
        %v1475 = vmul.f32 %v1347, 0.1
        %v1476 = vmul.f32 %v1348, 0.1
        %v1477 = vmul.f32 %v1349, 0.1
        %v1478 = vmul.f32 %v1350, 0.1
        %v1479 = vmul.f32 %v1351, 0.1
        %v1480 = vmul.f32 %v1352, 0.1
        %v1481 = vmul.f32 %v1353, 0.1
        %v1482 = vmul.f32 %v1354, 0.1
        %v1483 = vmul.f32 %v1355, 0.1
        %v1484 = vmul.f32 %v1356, 0.1
        %v1485 = vmul.f32 %v1357, 0.1
        %v1486 = vmul.f32 %v1358, 0.1
        %v1487 = vmul.f32 %v1359, 0.1
        %v1488 = vmul.f32 %v1360, 0.1
        %v1489 = vmul.f32 %v1361, 0.1
        %v1490 = vmul.f32 %v1362, 0.1
        %v1491 = vmul.f32 %v1363, 0.1
        %v1492 = vmul.f32 %v1364, 0.1
        %v1493 = vmul.f32 %v1365, 0.1
        %v1494 = vmul.f32 %v1366, 0.1
        %v1495 = vmul.f32 %v1367, 0.1
        %v1496 = vmul.f32 %v1368, 0.1
        %v1497 = vmul.f32 %v1369, 0.1
        %v1498 = vmul.f32 %v1370, 0.1
        %v1499 = vmul.f32 %v1371, 0.1
        %v1500 = vmul.f32 %v1372, 0.1
        %v1501 = vmul.f32 %v1373, 0.1
        %v1502 = vmul.f32 %v1374, 0.1
        %v1503 = vmul.f32 %v1375, 0.1
        %v1504 = vmul.f32 %v1376, 0.1
        %v1505 = vmul.f32 %v1377, 0.1
        %v1506 = vmul.f32 %v1378, 0.1
        %v1507 = vsel %vm1379, %v1315, %v1443
        %v1508 = vsel %vm1380, %v1316, %v1444
        %v1509 = vsel %vm1381, %v1317, %v1445
        %v1510 = vsel %vm1382, %v1318, %v1446
        %v1511 = vsel %vm1383, %v1319, %v1447
        %v1512 = vsel %vm1384, %v1320, %v1448
        %v1513 = vsel %vm1385, %v1321, %v1449
        %v1514 = vsel %vm1386, %v1322, %v1450
        %v1515 = vsel %vm1387, %v1323, %v1451
        %v1516 = vsel %vm1388, %v1324, %v1452
        %v1517 = vsel %vm1389, %v1325, %v1453
        %v1518 = vsel %vm1390, %v1326, %v1454
        %v1519 = vsel %vm1391, %v1327, %v1455
        %v1520 = vsel %vm1392, %v1328, %v1456
        %v1521 = vsel %vm1393, %v1329, %v1457
        %v1522 = vsel %vm1394, %v1330, %v1458
        %v1523 = vsel %vm1395, %v1331, %v1459
        %v1524 = vsel %vm1396, %v1332, %v1460
        %v1525 = vsel %vm1397, %v1333, %v1461
        %v1526 = vsel %vm1398, %v1334, %v1462
        %v1527 = vsel %vm1399, %v1335, %v1463
        %v1528 = vsel %vm1400, %v1336, %v1464
        %v1529 = vsel %vm1401, %v1337, %v1465
        %v1530 = vsel %vm1402, %v1338, %v1466
        %v1531 = vsel %vm1403, %v1339, %v1467
        %v1532 = vsel %vm1404, %v1340, %v1468
        %v1533 = vsel %vm1405, %v1341, %v1469
        %v1534 = vsel %vm1406, %v1342, %v1470
        %v1535 = vsel %vm1407, %v1343, %v1471
        %v1536 = vsel %vm1408, %v1344, %v1472
        %v1537 = vsel %vm1409, %v1345, %v1473
        %v1538 = vsel %vm1410, %v1346, %v1474
        %v1539 = vsel %vm1411, %v1347, %v1475
        %v1540 = vsel %vm1412, %v1348, %v1476
        %v1541 = vsel %vm1413, %v1349, %v1477
        %v1542 = vsel %vm1414, %v1350, %v1478
        %v1543 = vsel %vm1415, %v1351, %v1479
        %v1544 = vsel %vm1416, %v1352, %v1480
        %v1545 = vsel %vm1417, %v1353, %v1481
        %v1546 = vsel %vm1418, %v1354, %v1482
        %v1547 = vsel %vm1419, %v1355, %v1483
        %v1548 = vsel %vm1420, %v1356, %v1484
        %v1549 = vsel %vm1421, %v1357, %v1485
        %v1550 = vsel %vm1422, %v1358, %v1486
        %v1551 = vsel %vm1423, %v1359, %v1487
        %v1552 = vsel %vm1424, %v1360, %v1488
        %v1553 = vsel %vm1425, %v1361, %v1489
        %v1554 = vsel %vm1426, %v1362, %v1490
        %v1555 = vsel %vm1427, %v1363, %v1491
        %v1556 = vsel %vm1428, %v1364, %v1492
        %v1557 = vsel %vm1429, %v1365, %v1493
        %v1558 = vsel %vm1430, %v1366, %v1494
        %v1559 = vsel %vm1431, %v1367, %v1495
        %v1560 = vsel %vm1432, %v1368, %v1496
        %v1561 = vsel %vm1433, %v1369, %v1497
        %v1562 = vsel %vm1434, %v1370, %v1498
        %v1563 = vsel %vm1435, %v1371, %v1499
        %v1564 = vsel %vm1436, %v1372, %v1500
        %v1565 = vsel %vm1437, %v1373, %v1501
        %v1566 = vsel %vm1438, %v1374, %v1502
        %v1567 = vsel %vm1439, %v1375, %v1503
        %v1568 = vsel %vm1440, %v1376, %v1504
        %v1569 = vsel %vm1441, %v1377, %v1505
        %v1570 = vsel %vm1442, %v1378, %v1506
        %1571 = vst [vmem:[%s298] sm:$0xff] %v1507
        %1572 = vst [vmem:[%s298 + $0x8] sm:$0xff] %v1508
        %1573 = vst [vmem:[%s298 + $0x10] sm:$0xff] %v1509
        %1574 = vst [vmem:[%s298 + $0x18] sm:$0xff] %v1510
        %1575 = vst [vmem:[%s298 + $0x20] sm:$0xff] %v1511
        %1576 = vst [vmem:[%s298 + $0x28] sm:$0xff] %v1512
        %1577 = vst [vmem:[%s298 + $0x30] sm:$0xff] %v1513
        %1578 = vst [vmem:[%s298 + $0x38] sm:$0xff] %v1514
        %1579 = vst [vmem:[%s298 + $0x40] sm:$0xff] %v1515
        %1580 = vst [vmem:[%s298 + $0x48] sm:$0xff] %v1516
        %1581 = vst [vmem:[%s298 + $0x50] sm:$0xff] %v1517
        %1582 = vst [vmem:[%s298 + $0x58] sm:$0xff] %v1518
        %1583 = vst [vmem:[%s298 + $0x60] sm:$0xff] %v1519
        %1584 = vst [vmem:[%s298 + $0x68] sm:$0xff] %v1520
        %1585 = vst [vmem:[%s298 + $0x70] sm:$0xff] %v1521
        %1586 = vst [vmem:[%s298 + $0x78] sm:$0xff] %v1522
        %1587 = vst [vmem:[%s298 + $0x80] sm:$0xff] %v1523
        %1588 = vst [vmem:[%s298 + $0x88] sm:$0xff] %v1524
        %1589 = vst [vmem:[%s298 + $0x90] sm:$0xff] %v1525
        %1590 = vst [vmem:[%s298 + $0x98] sm:$0xff] %v1526
        %1591 = vst [vmem:[%s298 + $0xa0] sm:$0xff] %v1527
        %1592 = vst [vmem:[%s298 + $0xa8] sm:$0xff] %v1528
        %1593 = vst [vmem:[%s298 + $0xb0] sm:$0xff] %v1529
        %1594 = vst [vmem:[%s298 + $0xb8] sm:$0xff] %v1530
        %1595 = vst [vmem:[%s298 + $0xc0] sm:$0xff] %v1531
        %1596 = vst [vmem:[%s298 + $0xc8] sm:$0xff] %v1532
        %1597 = vst [vmem:[%s298 + $0xd0] sm:$0xff] %v1533
        %1598 = vst [vmem:[%s298 + $0xd8] sm:$0xff] %v1534
        %1599 = vst [vmem:[%s298 + $0xe0] sm:$0xff] %v1535
        %1600 = vst [vmem:[%s298 + $0xe8] sm:$0xff] %v1536
        %1601 = vst [vmem:[%s298 + $0xf0] sm:$0xff] %v1537
        %1602 = vst [vmem:[%s298 + $0xf8] sm:$0xff] %v1538
        %1603 = vst [vmem:[%s298 + $0x100] sm:$0xff] %v1539
        %1604 = vst [vmem:[%s298 + $0x108] sm:$0xff] %v1540
        %1605 = vst [vmem:[%s298 + $0x110] sm:$0xff] %v1541
        %1606 = vst [vmem:[%s298 + $0x118] sm:$0xff] %v1542
        %1607 = vst [vmem:[%s298 + $0x120] sm:$0xff] %v1543
        %1608 = vst [vmem:[%s298 + $0x128] sm:$0xff] %v1544
        %1609 = vst [vmem:[%s298 + $0x130] sm:$0xff] %v1545
        %1610 = vst [vmem:[%s298 + $0x138] sm:$0xff] %v1546
        %1611 = vst [vmem:[%s298 + $0x140] sm:$0xff] %v1547
        %1612 = vst [vmem:[%s298 + $0x148] sm:$0xff] %v1548
        %1613 = vst [vmem:[%s298 + $0x150] sm:$0xff] %v1549
        %1614 = vst [vmem:[%s298 + $0x158] sm:$0xff] %v1550
        %1615 = vst [vmem:[%s298 + $0x160] sm:$0xff] %v1551
        %1616 = vst [vmem:[%s298 + $0x168] sm:$0xff] %v1552
        %1617 = vst [vmem:[%s298 + $0x170] sm:$0xff] %v1553
        %1618 = vst [vmem:[%s298 + $0x178] sm:$0xff] %v1554
        %1619 = vst [vmem:[%s298 + $0x180] sm:$0xff] %v1555
        %1620 = vst [vmem:[%s298 + $0x188] sm:$0xff] %v1556
        %1621 = vst [vmem:[%s298 + $0x190] sm:$0xff] %v1557
        %1622 = vst [vmem:[%s298 + $0x198] sm:$0xff] %v1558
        %1623 = vst [vmem:[%s298 + $0x1a0] sm:$0xff] %v1559
        %1624 = vst [vmem:[%s298 + $0x1a8] sm:$0xff] %v1560
        %1625 = vst [vmem:[%s298 + $0x1b0] sm:$0xff] %v1561
        %1626 = vst [vmem:[%s298 + $0x1b8] sm:$0xff] %v1562
        %1627 = vst [vmem:[%s298 + $0x1c0] sm:$0xff] %v1563
        %1628 = vst [vmem:[%s298 + $0x1c8] sm:$0xff] %v1564
        %1629 = vst [vmem:[%s298 + $0x1d0] sm:$0xff] %v1565
        %1630 = vst [vmem:[%s298 + $0x1d8] sm:$0xff] %v1566
        %1631 = vst [vmem:[%s298 + $0x1e0] sm:$0xff] %v1567
        %1632 = vst [vmem:[%s298 + $0x1e8] sm:$0xff] %v1568
        %1633 = vst [vmem:[%s298 + $0x1f0] sm:$0xff] %v1569
        %1634 = vst [vmem:[%s298 + $0x1f8] sm:$0xff] %v1570
      $region44: #{_matmul_affine_act.1} parent=35 // pred_fallthru
        _
      %s1635 = smul.u32 64, %s20
      %p1636 = scmp.lt.s32.totalorder %s1635, 511
      %s1637 = scalar_select %p1636, %s1635, 511
      %p1638 = scmp.lt.s32.totalorder %s21, 0
      %s1639 = scalar_select %p1638, %s21, 0
      %s1640 = sadd.s32 %s1639, %s1637
      %s1641 = smul.addr %s1640, 8
      %s1642 = scalar_lea.vmem %s4, %s1641
      // Predicated region
      $region45: #{_matmul_affine_act.1} parent=35 // pred_check
        %p1643 = pneg %p162
      $region46: #{_matmul_affine_act.1} parent=35 // pred_check_branch
        %1645 = sbr.rel (%p1643) target = $region48
      $region47: #{_matmul_affine_act.1} parent=35 // pred_region
        %s1646 = smul.u32 64, %s20
      $region48: #{_matmul_affine_act.1} parent=35 // pred_fallthru
        _
    $region36: #{_matmul_affine_act.1} parent=5 // pred_fallthru
      _
    %p1647 = scmp.le.s32.totalorder 2, %s10
    // Predicated region
    $region49: #{_matmul_affine_act.1} parent=5 // pred_check
      %p1648 = pneg %p1647
    $region50: #{_matmul_affine_act.1} parent=5 // pred_check_branch
      %1650 = sbr.rel (%p1648) target = $region52
    $region51: #{_matmul_affine_act.1} parent=5 // pred_region
      %s1651 = ssub.s32 %s10, 2
      // Predicated region
      $region53: #{_matmul_affine_act.1} parent=51 // pred_check
        %p1652 = pneg %p168
      $region54: #{_matmul_affine_act.1} parent=51 // pred_check_branch
        %1654 = sbr.rel (%p1652) target = $region56
      $region55: #{_matmul_affine_act.1} parent=51 // pred_region
        %s1655 = smul.u32 64, %s23
        %p1656 = scmp.lt.s32.totalorder %s1655, 511
        %s1657 = scalar_select %p1656, %s1655, 511
        %p1658 = scmp.lt.s32.totalorder %s24, 0
        %s1659 = scalar_select %p1658, %s24, 0
        %s1660 = sadd.s32 %s1659, %s1657
        %s1661 = smul.addr %s1660, 8
        %s1662 = scalar_lea.vmem %s4, %s1661
      $region56: #{_matmul_affine_act.1} parent=51 // pred_fallthru
        _
    $region52: #{_matmul_affine_act.1} parent=5 // pred_fallthru
      _
  $region6: #{_matmul_affine_act.1} parent=0 // loop_footer
    %s14 = sadd.s32 1, %s10
  $region7: #{_matmul_affine_act.1} parent=0 // loop_footer_branch
    %9 = sbr.rel target = $region3
  $region8: #{_matmul_affine_act.1} parent=0 // loop_exit
    _

</llo_original>
